<compile_context>
chip_gen: v6e
topology: v6e:2x2x1
jax: 0.10.0
libtpu: 0.0.40
codegen_flags: <defaults>
</compile_context>

<pallas_src>
import jax
import jax.numpy as jnp
from jax.experimental import pallas as pl
from jax.experimental.pallas import tpu as pltpu

_MIB = 1024 * 1024


def _round_up(x, m):
    return ((x + m - 1) // m) * m


# ----------------------------------------------------------------------------
# Kernels
# ----------------------------------------------------------------------------
def sae_resident_kernel(x_ref, we_ref, be_ref, wd_ref, bd_ref, out_ref):
    """Whole hidden dim resident in VMEM; batch axis streamed by the grid."""
    x = x_ref[...].astype(we_ref.dtype)            # in-kernel f32->bf16 cast
    h = jnp.dot(x, we_ref[...], preferred_element_type=jnp.float32)
    h = jnp.maximum(h + be_ref[...], 0.0)
    # L1Penalty.apply(h, l1weight) is the identity in the forward pass.
    y = jnp.dot(h.astype(wd_ref.dtype), wd_ref[...],
                preferred_element_type=jnp.float32)
    out_ref[...] = jax.nn.sigmoid(y + bd_ref[...]).astype(out_ref.dtype)


def sae_hidden_tiled_kernel(x_ref, we_ref, be_ref, wd_ref, bd_ref, out_ref,
                            acc_ref):
    """Hidden dim tiled (weights too big to keep resident).  The decoder
    contribution of each hidden tile is accumulated in an f32 scratch; bias +
    sigmoid run once in the finalize step.  Applying relu per hidden tile is
    exact because the encoder sums only over the (untiled) feature dim and
    the zero-padded hidden columns are inert."""
    j = pl.program_id(1)

    @pl.when(j == 0)
    def _():
        acc_ref[...] = jnp.zeros_like(acc_ref)

    x = x_ref[...].astype(we_ref.dtype)
    h = jnp.dot(x, we_ref[...], preferred_element_type=jnp.float32)
    h = jnp.maximum(h + be_ref[...], 0.0)
    acc_ref[...] += jnp.dot(h.astype(wd_ref.dtype), wd_ref[...],
                            preferred_element_type=jnp.float32)

    @pl.when(j == pl.num_programs(1) - 1)
    def _():
        out_ref[...] = jax.nn.sigmoid(acc_ref[...] + bd_ref[...]).astype(
            out_ref.dtype)


# ----------------------------------------------------------------------------
# Parameter prep (one-time): transpose to (in, out), pad to lane multiples of
# 128, cast matmul operands to the MXU compute dtype (biases stay f32).
# ----------------------------------------------------------------------------
def prepare_params(w_enc, b_enc, w_dec, b_dec, compute_dtype=jnp.bfloat16):
    hidden, feature = w_enc.shape
    f_pad = _round_up(feature, 128)
    h_pad = _round_up(hidden, 128)
    we_t = jnp.zeros((f_pad, h_pad), jnp.float32).at[:feature, :hidden].set(w_enc.T)
    wd_t = jnp.zeros((h_pad, f_pad), jnp.float32).at[:hidden, :feature].set(w_dec.T)
    be = jnp.zeros((1, h_pad), jnp.float32).at[0, :hidden].set(b_enc)
    bd = jnp.zeros((1, f_pad), jnp.float32).at[0, :feature].set(b_dec)
    return {
        "we_t": we_t.astype(compute_dtype),   # (Fp, Hp)
        "wd_t": wd_t.astype(compute_dtype),   # (Hp, Fp)
        "be": be,                             # (1, Hp) f32
        "bd": bd,                             # (1, Fp) f32
    }


# ----------------------------------------------------------------------------
# Planning: generation-aware VMEM budget, batch-tile choice, fallback decision.
# ----------------------------------------------------------------------------
def _vmem_capacity_bytes():
    try:
        return int(pltpu.get_tpu_info().vmem_capacity_bytes)
    except Exception:
        return 64 * _MIB            # conservative default (v7x per-TC)


_TB_CANDIDATES = (2048, 1024, 512, 256, 128, 64, 32, 16)


def _plan(batch, f_pad, h_pad, wbytes, x_bytes, out_bytes,
          force_hidden_tiled=False, hidden_tile=None):
    cap = _vmem_capacity_bytes()
    if cap >= 100 * _MIB:                         # v5e / v6e: 128 MiB VMEM
        budget, limit_cap = 96 * _MIB, 100 * _MIB
    else:                                         # v7x: 64 MiB per TC; each of the
        budget, limit_cap = 40 * _MIB, 50 * _MIB  # 2 TCs holds its own weight copy
    batch16 = _round_up(max(batch, 16), 16)

    def stream(tb):                               # double-buffered x / out tiles
        return 2 * tb * f_pad * (x_bytes + out_bytes)

    # Resident weights are single-buffered (constant index_map) -> one copy each.
    resident_fixed = 2 * f_pad * h_pad * wbytes + 4 * (h_pad + f_pad)

    if not force_hidden_tiled and resident_fixed + stream(16) <= budget:
        tb = 16
        for cand in _TB_CANDIDATES:
            if resident_fixed + stream(cand) <= budget:
                tb = cand
                break
        tb = _round_up(min(tb, batch16), 16)
        need = resident_fixed + stream(tb)
        return dict(mode="resident", tb=tb, th=None,
                    vmem_limit=int(min(limit_cap, max(32 * _MIB, 1.25 * need))))

    # Hidden-dim-tiled fallback (weights do not fit resident in VMEM).
    tb = _round_up(min(256, batch16), 16)
    fixed_bt = tb * f_pad * 4 + stream(tb) + 8 * f_pad      # acc + x/out + b_dec
    avail = budget - fixed_bt
    if hidden_tile is not None:
        th = hidden_tile                                    # must divide h_pad
    else:
        th, cand = 128, h_pad
        while cand >= 128:
            if (h_pad % cand == 0 and cand % 128 == 0 and
                    2 * cand * (2 * f_pad * wbytes + 4) <= avail):
                th = cand
                break
            cand -= 128
    need = fixed_bt + 2 * th * (2 * f_pad * wbytes + 4)
    return dict(mode="hidden_tiled", tb=tb, th=th,
                vmem_limit=int(min(limit_cap, max(32 * _MIB, 1.25 * need))))


# ----------------------------------------------------------------------------
# pallas_call builders
# ----------------------------------------------------------------------------
def _maybe_buffered_spec(shape, index_map, buffers):
    if buffers is None:
        return pl.BlockSpec(shape, index_map)
    return pl.BlockSpec(shape, index_map, pipeline_mode=pl.Buffered(buffers))


def _call_resident(x_in, we_t, be, wd_t, bd, tb, padded_batch, out_dtype,
                   vmem_limit, cost, single_buffer_weights):
    f_pad, h_pad = we_t.shape
    rb = 1 if single_buffer_weights else None
    return pl.pallas_call(
        sae_resident_kernel,
        out_shape=jax.ShapeDtypeStruct((padded_batch, f_pad), out_dtype),
        grid_spec=pltpu.PrefetchScalarGridSpec(
            num_scalar_prefetch=0,
            grid=(padded_batch // tb,),
            in_specs=[
                pl.BlockSpec((tb, f_pad), lambda i: (i, 0)),                  # x tile (native dtype)
                _maybe_buffered_spec((f_pad, h_pad), lambda i: (0, 0), rb),   # W_enc^T (resident)
                _maybe_buffered_spec((1, h_pad), lambda i: (0, 0), rb),       # b_enc   (resident)
                _maybe_buffered_spec((h_pad, f_pad), lambda i: (0, 0), rb),   # W_dec^T (resident)
                _maybe_buffered_spec((1, f_pad), lambda i: (0, 0), rb),       # b_dec   (resident)
            ],
            out_specs=pl.BlockSpec((tb, f_pad), lambda i: (i, 0)),
        ),
        compiler_params=pltpu.CompilerParams(
            dimension_semantics=("parallel",),
            vmem_limit_bytes=vmem_limit,
        ),
        cost_estimate=cost,
    )(x_in, we_t, be, wd_t, bd)


def _call_hidden_tiled(x_in, we_t, be, wd_t, bd, tb, th, padded_batch,
                       out_dtype, vmem_limit, cost):
    f_pad, h_pad = we_t.shape
    return pl.pallas_call(
        sae_hidden_tiled_kernel,
        out_shape=jax.ShapeDtypeStruct((padded_batch, f_pad), out_dtype),
        grid_spec=pltpu.PrefetchScalarGridSpec(
            num_scalar_prefetch=0,
            grid=(padded_batch // tb, h_pad // th),
            in_specs=[
                pl.BlockSpec((tb, f_pad), lambda i, j: (i, 0)),   # x tile (revisited over j)
                pl.BlockSpec((f_pad, th), lambda i, j: (0, j)),   # W_enc^T hidden slice
                pl.BlockSpec((1, th), lambda i, j: (0, j)),       # b_enc hidden slice
                pl.BlockSpec((th, f_pad), lambda i, j: (j, 0)),   # W_dec^T hidden slice
                pl.BlockSpec((1, f_pad), lambda i, j: (0, 0)),    # b_dec
            ],
            out_specs=pl.BlockSpec((tb, f_pad), lambda i, j: (i, 0)),
            scratch_shapes=[pltpu.VMEM((tb, f_pad), jnp.float32)],
        ),
        compiler_params=pltpu.CompilerParams(
            dimension_semantics=("parallel", "arbitrary"),
            vmem_limit_bytes=vmem_limit,
        ),
        cost_estimate=cost,
    )(x_in, we_t, be, wd_t, bd)


# ----------------------------------------------------------------------------
# Forward wrapper
# ----------------------------------------------------------------------------
def sae_forward(x, params, feature_size, *, force_hidden_tiled=False,
                hidden_tile=None):
    """x: any shape whose total size is a multiple of feature_size (NCHW etc.).
    Returns an array of the same shape and dtype as x."""
    orig_shape = x.shape
    x2d = x.reshape(-1, feature_size)                 # == input.view(-1, F)
    batch = x2d.shape[0]
    out_dtype = x2d.dtype

    we_t, wd_t = params["we_t"], params["wd_t"]
    be, bd = params["be"], params["bd"]
    f_pad, h_pad = we_t.shape

    plan = _plan(batch, f_pad, h_pad, we_t.dtype.itemsize,
                 x2d.dtype.itemsize, jnp.dtype(out_dtype).itemsize,
                 force_hidden_tiled=force_hidden_tiled, hidden_tile=hidden_tile)
    tb = plan["tb"]
    padded_batch = _round_up(max(batch, tb), tb)

    # Pad only when needed (rows to the batch tile, cols to the lane multiple);
    # x stays in its native dtype -- the bf16 cast happens inside the kernel.
    pad_rows = padded_batch - batch
    pad_cols = f_pad - feature_size
    x_in = (jnp.pad(x2d, ((0, pad_rows), (0, pad_cols)))
            if (pad_rows or pad_cols) else x2d)

    cost = pl.CostEstimate(
        flops=4 * padded_batch * f_pad * h_pad,       # encoder + decoder matmuls
        transcendentals=padded_batch * f_pad,         # sigmoid exp
        bytes_accessed=(padded_batch * f_pad * (x2d.dtype.itemsize
                                                + jnp.dtype(out_dtype).itemsize)
                        + 2 * f_pad * h_pad * we_t.dtype.itemsize
                        + 4 * (f_pad + h_pad)),
    )

    if plan["mode"] == "resident":
        try:
            out2d = _call_resident(x_in, we_t, be, wd_t, bd, tb, padded_batch,
                                   out_dtype, plan["vmem_limit"], cost,
                                   single_buffer_weights=True)
        except Exception:
            # Fallback for jax versions that reject pipeline_mode=pl.Buffered(1).
            out2d = _call_resident(x_in, we_t, be, wd_t, bd, tb, padded_batch,
                                   out_dtype, plan["vmem_limit"], cost,
                                   single_buffer_weights=False)
    else:
        out2d = _call_hidden_tiled(x_in, we_t, be, wd_t, bd, tb, plan["th"],
                                   padded_batch, out_dtype, plan["vmem_limit"],
                                   cost)

    if pad_rows or pad_cols:
        out2d = out2d[:batch, :feature_size]
    return out2d.reshape(orig_shape)                  # == .view_as(input)


# ----------------------------------------------------------------------------
# Self-test
# ----------------------------------------------------------------------------
def _torch_linear_init(key, out_dim, in_dim):
    # PyTorch nn.Linear default init: U(-1/sqrt(in), 1/sqrt(in)), (out, in) layout.
    bound = 1.0 / (in_dim ** 0.5)
    kw, kb = jax.random.split(key)
    w = jax.random.uniform(kw, (out_dim, in_dim), minval=-bound, maxval=bound,
                           dtype=jnp.float32)
    b = jax.random.uniform(kb, (out_dim,), minval=-bound, maxval=bound,
                           dtype=jnp.float32)
    return w, b


def _reference(x, w_enc, b_enc, w_dec, b_dec, feature_size):
    to_bf = lambda a: a.astype(jnp.bfloat16).astype(jnp.float32)
    x2d = x.reshape(-1, feature_size)
    # bf16-operand / f32-accumulate (matches kernel math closely).
    h = jnp.maximum(to_bf(x2d) @ to_bf(w_enc).T + b_enc, 0.0)
    y_bf = jax.nn.sigmoid(to_bf(h) @ to_bf(w_dec).T + b_dec).reshape(x.shape)
    # Pure f32 PyTorch semantics (loose tolerance covers the bf16 cast error).
    h32 = jnp.maximum(x2d @ w_enc.T + b_enc, 0.0)
    y32 = jax.nn.sigmoid(h32 @ w_dec.T + b_dec).reshape(x.shape)
    return y_bf, y32


if __name__ == "__main__":
    key = jax.random.PRNGKey(0)
    k_x1, k_enc1, k_dec1, k_x2, k_enc2, k_dec2 = jax.random.split(key, 6)

    # ---- Test 1: image-like input, small hidden -> resident-weight path ----
    N, C, H, W = 2, 4, 16, 16
    feature_size = C * H * W          # 1024 (lane-dense)
    hidden_size = 32                  # padded to 128 inside prepare_params
    l1weight = 0.1                    # identity in the forward pass
    # TODO(synk): L1Penalty only alters the backward pass (adds l1weight*sign(h)
    # to the gradient); a custom VJP would be needed for training, not forward.

    x = jax.random.normal(k_x1, (N, C, H, W), dtype=jnp.float32)
    w_enc, b_enc = _torch_linear_init(k_enc1, hidden_size, feature_size)
    w_dec, b_dec = _torch_linear_init(k_dec1, feature_size, hidden_size)

    params = prepare_params(w_enc, b_enc, w_dec, b_dec)
    out = sae_forward(x, params, feature_size)
    jax.block_until_ready(out)

    y_bf, y32 = _reference(x, w_enc, b_enc, w_dec, b_dec, feature_size)
    assert out.shape == x.shape and out.dtype == x.dtype
    assert jnp.allclose(out, y_bf, atol=2e-3, rtol=2e-3), \
        float(jnp.max(jnp.abs(out - y_bf)))
    assert jnp.allclose(out, y32, atol=5e-2, rtol=0.0), \
        float(jnp.max(jnp.abs(out - y32)))

    # ---- Test 2: exercise the hidden-dim-tiled fallback path (2 H tiles) ----
    feature2, hidden2 = 1024, 256
    x2 = jax.random.normal(k_x2, (4, feature2), dtype=jnp.float32)
    w_enc2, b_enc2 = _torch_linear_init(k_enc2, hidden2, feature2)
    w_dec2, b_dec2 = _torch_linear_init(k_dec2, feature2, hidden2)
    params2 = prepare_params(w_enc2, b_enc2, w_dec2, b_dec2)
    out2 = sae_forward(x2, params2, feature2,
                       force_hidden_tiled=True, hidden_tile=128)
    jax.block_until_ready(out2)

    y_bf2, y32_2 = _reference(x2, w_enc2, b_enc2, w_dec2, b_dec2, feature2)
    assert out2.shape == x2.shape
    assert jnp.allclose(out2, y_bf2, atol=2e-3, rtol=2e-3), \
        float(jnp.max(jnp.abs(out2 - y_bf2)))
    assert jnp.allclose(out2, y32_2, atol=5e-2, rtol=0.0), \
        float(jnp.max(jnp.abs(out2 - y32_2)))

    print("KERNEL_OK")
</pallas_src>

<mosaic_0001>
module attributes {stable_mosaic.version = 11 : i64} {
  func.func @sae_resident_kernel(%arg0: i32, %arg1: memref<16x1024xf32, #tpu.memory_space<vmem>>, %arg2: memref<1024x128xbf16, #tpu.memory_space<vmem>>, %arg3: memref<1x128xf32, #tpu.memory_space<vmem>>, %arg4: memref<128x1024xbf16, #tpu.memory_space<vmem>>, %arg5: memref<1x1024xf32, #tpu.memory_space<vmem>>, %arg6: memref<16x1024xf32, #tpu.memory_space<vmem>>) attributes {dimension_semantics = [#tpu.dimension_semantics<parallel>], iteration_bounds = array<i64: 1>, scalar_prefetch = 0 : i64, scratch_operands = 0 : i64, tpu.core_type = #tpu.core_type<tc>, window_params = [{transform_indices = @transform_0, window_bounds = array<i64: 16, 1024>}, {pipeline_mode = #tpu.pipeline_mode<synchronous>, transform_indices = @transform_1, window_bounds = array<i64: 1024, 128>}, {pipeline_mode = #tpu.pipeline_mode<synchronous>, transform_indices = @transform_2, window_bounds = array<i64: 1, 128>}, {pipeline_mode = #tpu.pipeline_mode<synchronous>, transform_indices = @transform_3, window_bounds = array<i64: 128, 1024>}, {pipeline_mode = #tpu.pipeline_mode<synchronous>, transform_indices = @transform_4, window_bounds = array<i64: 1, 1024>}, {transform_indices = @transform_5, window_bounds = array<i64: 16, 1024>}]} {
    %c0 = arith.constant 0 : index
    %c0_0 = arith.constant 0 : index
    %0 = vector.load %arg1[%c0, %c0_0] : memref<16x1024xf32, #tpu.memory_space<vmem>>, vector<16x1024xf32>
    %1 = arith.truncf %0 : vector<16x1024xf32> to vector<16x1024xbf16>
    %c0_1 = arith.constant 0 : index
    %c0_2 = arith.constant 0 : index
    %2 = vector.load %arg2[%c0_1, %c0_2] : memref<1024x128xbf16, #tpu.memory_space<vmem>>, vector<1024x128xbf16>
    %cst = arith.constant dense<0.000000e+00> : vector<16x128xf32>
    %3 = tpu.matmul %1, %2, %cst {dimension_numbers = #tpu.dot_dimension_numbers<[1], [0], [0], [1], [0, 0, 1, 1], [], []>} : vector<16x1024xbf16>, vector<1024x128xbf16>, vector<16x128xf32> -> vector<16x128xf32>
    %c0_3 = arith.constant 0 : index
    %c0_4 = arith.constant 0 : index
    %4 = vector.load %arg3[%c0_3, %c0_4] : memref<1x128xf32, #tpu.memory_space<vmem>>, vector<1x128xf32>
    %5 = vector.broadcast %4 : vector<1x128xf32> to vector<16x128xf32>
    %6 = arith.addf %3, %5 : vector<16x128xf32>
    %cst_5 = arith.constant 0.000000e+00 : f32
    %7 = vector.broadcast %cst_5 : f32 to vector<16x128xf32>
    %8 = arith.maximumf %6, %7 : vector<16x128xf32>
    %9 = arith.truncf %8 : vector<16x128xf32> to vector<16x128xbf16>
    %c0_6 = arith.constant 0 : index
    %c0_7 = arith.constant 0 : index
    %10 = vector.load %arg4[%c0_6, %c0_7] : memref<128x1024xbf16, #tpu.memory_space<vmem>>, vector<128x1024xbf16>
    %cst_8 = arith.constant dense<0.000000e+00> : vector<16x1024xf32>
    %11 = tpu.matmul %9, %10, %cst_8 {dimension_numbers = #tpu.dot_dimension_numbers<[1], [0], [0], [1], [0, 0, 1, 1], [], []>} : vector<16x128xbf16>, vector<128x1024xbf16>, vector<16x1024xf32> -> vector<16x1024xf32>
    %c0_9 = arith.constant 0 : index
    %c0_10 = arith.constant 0 : index
    %12 = vector.load %arg5[%c0_9, %c0_10] : memref<1x1024xf32, #tpu.memory_space<vmem>>, vector<1x1024xf32>
    %13 = vector.broadcast %12 : vector<1x1024xf32> to vector<16x1024xf32>
    %14 = arith.addf %11, %13 : vector<16x1024xf32>
    %15 = arith.negf %14 : vector<16x1024xf32>
    %16 = math.exp %15 : vector<16x1024xf32>
    %cst_11 = arith.constant 1.000000e+00 : f32
    %17 = vector.broadcast %cst_11 : f32 to vector<16x1024xf32>
    %18 = arith.addf %17, %16 : vector<16x1024xf32>
    %19 = arith.divf %17, %18 : vector<16x1024xf32>
    %c0_12 = arith.constant 0 : index
    %c0_13 = arith.constant 0 : index
    %20 = vector.load %arg6[%c0_12, %c0_13] : memref<16x1024xf32, #tpu.memory_space<vmem>>, vector<16x1024xf32>
    tpu.vector_store %arg6[%c0_12, %c0_13], %19 {strides = array<i32>} : memref<16x1024xf32, #tpu.memory_space<vmem>>, vector<16x1024xf32>,
    return
  }
  func.func @transform_0(%arg0: i32) -> (i32, i32) {
    %c0_i32 = arith.constant 0 : i32
    %c0_i32_0 = arith.constant 0 : i32
    return %arg0, %c0_i32 : i32, i32
  }
  func.func @transform_1(%arg0: i32) -> (i32, i32) {
    %c0_i32 = arith.constant 0 : i32
    %c0_i32_0 = arith.constant 0 : i32
    %c0_i32_1 = arith.constant 0 : i32
    return %c0_i32, %c0_i32_0 : i32, i32
  }
  func.func @transform_2(%arg0: i32) -> (i32, i32) {
    %c0_i32 = arith.constant 0 : i32
    %c0_i32_0 = arith.constant 0 : i32
    %c0_i32_1 = arith.constant 0 : i32
    return %c0_i32, %c0_i32_0 : i32, i32
  }
  func.func @transform_3(%arg0: i32) -> (i32, i32) {
    %c0_i32 = arith.constant 0 : i32
    %c0_i32_0 = arith.constant 0 : i32
    %c0_i32_1 = arith.constant 0 : i32
    return %c0_i32, %c0_i32_0 : i32, i32
  }
  func.func @transform_4(%arg0: i32) -> (i32, i32) {
    %c0_i32 = arith.constant 0 : i32
    %c0_i32_0 = arith.constant 0 : i32
    %c0_i32_1 = arith.constant 0 : i32
    return %c0_i32, %c0_i32_0 : i32, i32
  }
  func.func @transform_5(%arg0: i32) -> (i32, i32) {
    %c0_i32 = arith.constant 0 : i32
    %c0_i32_0 = arith.constant 0 : i32
    return %arg0, %c0_i32 : i32, i32
  }
}

module attributes {stable_mosaic.version = 11 : i64} {
  func.func @sae_resident_kernel(%arg0: i32, %arg1: memref<16x1024xf32, #tpu.memory_space<vmem>>, %arg2: memref<1024x128xbf16, #tpu.memory_space<vmem>>, %arg3: memref<1x128xf32, #tpu.memory_space<vmem>>, %arg4: memref<128x1024xbf16, #tpu.memory_space<vmem>>, %arg5: memref<1x1024xf32, #tpu.memory_space<vmem>>, %arg6: memref<16x1024xf32, #tpu.memory_space<vmem>>) attributes {dimension_semantics = [#tpu.dimension_semantics<parallel>], iteration_bounds = array<i64: 1>, scalar_prefetch = 0 : i64, scratch_operands = 0 : i64, tpu.core_type = #tpu.core_type<tc>, window_params = [{transform_indices = @transform_0, window_bounds = array<i64: 16, 1024>}, {pipeline_mode = #tpu.pipeline_mode<synchronous>, transform_indices = @transform_1, window_bounds = array<i64: 1024, 128>}, {pipeline_mode = #tpu.pipeline_mode<synchronous>, transform_indices = @transform_2, window_bounds = array<i64: 1, 128>}, {pipeline_mode = #tpu.pipeline_mode<synchronous>, transform_indices = @transform_3, window_bounds = array<i64: 128, 1024>}, {pipeline_mode = #tpu.pipeline_mode<synchronous>, transform_indices = @transform_4, window_bounds = array<i64: 1, 1024>}, {transform_indices = @transform_5, window_bounds = array<i64: 16, 1024>}]} {
    %c0 = arith.constant 0 : index
    %c0_0 = arith.constant 0 : index
    %0 = vector.load %arg1[%c0, %c0_0] : memref<16x1024xf32, #tpu.memory_space<vmem>>, vector<16x1024xf32>
    %1 = arith.truncf %0 : vector<16x1024xf32> to vector<16x1024xbf16>
    %c0_1 = arith.constant 0 : index
    %c0_2 = arith.constant 0 : index
    %2 = vector.load %arg2[%c0_1, %c0_2] : memref<1024x128xbf16, #tpu.memory_space<vmem>>, vector<1024x128xbf16>
    %cst = arith.constant dense<0.000000e+00> : vector<16x128xf32>
    %3 = tpu.matmul %1, %2, %cst {dimension_numbers = #tpu.dot_dimension_numbers<[1], [0], [0], [1], [0, 0, 1, 1], [], []>} : vector<16x1024xbf16>, vector<1024x128xbf16>, vector<16x128xf32> -> vector<16x128xf32>
    %c0_3 = arith.constant 0 : index
    %c0_4 = arith.constant 0 : index
    %4 = vector.load %arg3[%c0_3, %c0_4] : memref<1x128xf32, #tpu.memory_space<vmem>>, vector<1x128xf32>
    %5 = vector.broadcast %4 : vector<1x128xf32> to vector<16x128xf32>
    %6 = arith.addf %3, %5 : vector<16x128xf32>
    %cst_5 = arith.constant 0.000000e+00 : f32
    %7 = vector.broadcast %cst_5 : f32 to vector<16x128xf32>
    %8 = arith.maximumf %6, %7 : vector<16x128xf32>
    %9 = arith.truncf %8 : vector<16x128xf32> to vector<16x128xbf16>
    %c0_6 = arith.constant 0 : index
    %c0_7 = arith.constant 0 : index
    %10 = vector.load %arg4[%c0_6, %c0_7] : memref<128x1024xbf16, #tpu.memory_space<vmem>>, vector<128x1024xbf16>
    %cst_8 = arith.constant dense<0.000000e+00> : vector<16x1024xf32>
    %11 = tpu.matmul %9, %10, %cst_8 {dimension_numbers = #tpu.dot_dimension_numbers<[1], [0], [0], [1], [0, 0, 1, 1], [], []>} : vector<16x128xbf16>, vector<128x1024xbf16>, vector<16x1024xf32> -> vector<16x1024xf32>
    %c0_9 = arith.constant 0 : index
    %c0_10 = arith.constant 0 : index
    %12 = vector.load %arg5[%c0_9, %c0_10] : memref<1x1024xf32, #tpu.memory_space<vmem>>, vector<1x1024xf32>
    %13 = vector.broadcast %12 : vector<1x1024xf32> to vector<16x1024xf32>
    %14 = arith.addf %11, %13 : vector<16x1024xf32>
    %15 = arith.negf %14 : vector<16x1024xf32>
    %16 = math.exp %15 : vector<16x1024xf32>
    %cst_11 = arith.constant 1.000000e+00 : f32
    %17 = vector.broadcast %cst_11 : f32 to vector<16x1024xf32>
    %18 = arith.addf %17, %16 : vector<16x1024xf32>
    %19 = arith.divf %17, %18 : vector<16x1024xf32>
    %c0_12 = arith.constant 0 : index
    %c0_13 = arith.constant 0 : index
    %20 = vector.load %arg6[%c0_12, %c0_13] : memref<16x1024xf32, #tpu.memory_space<vmem>>, vector<16x1024xf32>
    tpu.vector_store %arg6[%c0_12, %c0_13], %19 {strides = array<i32>} : memref<16x1024xf32, #tpu.memory_space<vmem>>, vector<16x1024xf32>,
    return
  }
  func.func @transform_0(%arg0: i32) -> (i32, i32) {
    %c0_i32 = arith.constant 0 : i32
    %c0_i32_0 = arith.constant 0 : i32
    return %arg0, %c0_i32 : i32, i32
  }
  func.func @transform_1(%arg0: i32) -> (i32, i32) {
    %c0_i32 = arith.constant 0 : i32
    %c0_i32_0 = arith.constant 0 : i32
    %c0_i32_1 = arith.constant 0 : i32
    return %c0_i32, %c0_i32_0 : i32, i32
  }
  func.func @transform_2(%arg0: i32) -> (i32, i32) {
    %c0_i32 = arith.constant 0 : i32
    %c0_i32_0 = arith.constant 0 : i32
    %c0_i32_1 = arith.constant 0 : i32
    return %c0_i32, %c0_i32_0 : i32, i32
  }
  func.func @transform_3(%arg0: i32) -> (i32, i32) {
    %c0_i32 = arith.constant 0 : i32
    %c0_i32_0 = arith.constant 0 : i32
    %c0_i32_1 = arith.constant 0 : i32
    return %c0_i32, %c0_i32_0 : i32, i32
  }
  func.func @transform_4(%arg0: i32) -> (i32, i32) {
    %c0_i32 = arith.constant 0 : i32
    %c0_i32_0 = arith.constant 0 : i32
    %c0_i32_1 = arith.constant 0 : i32
    return %c0_i32, %c0_i32_0 : i32, i32
  }
  func.func @transform_5(%arg0: i32) -> (i32, i32) {
    %c0_i32 = arith.constant 0 : i32
    %c0_i32_0 = arith.constant 0 : i32
    return %arg0, %c0_i32 : i32, i32
  }
}

</mosaic_0001>

<llo_original>
// kernel: tpu_custom_call.1
$region0: #{tpu_custom_call.1}
  #allocation0 [shape = 'u32[]', space=smem, size = 0x4, offset = 0x4, fixed_abs, tag = 'smem constant byte address 0x4 - core index']
  #allocation1 [shape = 'u32[144,128]{1,0:T(1,128)}', space=vmem, size = 0x12000, scoped, tag = 'internal scratch']
  %s0 = inlined_call_operand.hbm [shape: f32[16,1024], index: 0, kind: input, shape index: {}]
  %s1 = inlined_call_operand.hbm [shape: bf16[1024,128], index: 1, kind: input, shape index: {}]
  %s2 = inlined_call_operand.vmem [shape: f32[1,128], index: 2, kind: input, shape index: {}]
  %s3 = inlined_call_operand.hbm [shape: bf16[128,1024], index: 3, kind: input, shape index: {}]
  %s4 = inlined_call_operand.hbm [shape: f32[1,1024], index: 4, kind: input, shape index: {}]
  %s5 = inlined_call_operand.hbm [shape: f32[16,1024], index: 5, kind: output, shape index: {}]
  %s6 = sld [smem:[#allocation0]]
  $region46: #{tpu_custom_call.1} parent=0
    _
  %s8 = ssub.s32 1, %s6
  %s9 = scalar_select 0, %s8, %s6
  $region1: #{tpu_custom_call.1} parent=0
    #allocation2 [shape = 'u8[65536]{0}', space=vmem, size = 0x10000, scoped, tag = 'input window, operand 0, single buffered']
    #allocation3 [shape = 's32[1]{0}', space=sflag, size = 0x4, scoped, tag = 'scoped memory for tpu_custom_call.1']
    #allocation4 [shape = 's32[1]{0}', space=sflag, size = 0x4, scoped, tag = 'scoped memory for tpu_custom_call.1']
    #allocation5 [shape = 'u8[262144]{0}', space=vmem, size = 0x40000, scoped, tag = 'input window, operand 1, single buffered']
    #allocation6 [shape = 's32[1]{0}', space=sflag, size = 0x4, scoped, tag = 'scoped memory for tpu_custom_call.1']
    #allocation7 [shape = 'u8[262144]{0}', space=vmem, size = 0x40000, scoped, tag = 'input window, operand 3, single buffered']
    #allocation8 [shape = 'u8[4096]{0}', space=vmem, size = 0x1000, scoped, tag = 'input window, operand 4, single buffered']
    #allocation9 [shape = 's32[1]{0}', space=sflag, size = 0x4, scoped, tag = 'scoped memory for tpu_custom_call.1']
    #allocation10 [shape = 'u8[65536]{0}', space=vmem, size = 0x10000, scoped, tag = 'output window, operand 0, single buffered']
    %10 = vsyncpa [#allocation3], 0
    %11 = vsyncpa [#allocation6], 0
    %12 = vsyncpa [#allocation9], 0
    %13 = vsyncpa [#allocation4], 0
    // Predicated region
    $region2: #{tpu_custom_call.1} parent=1 // pred_check
      _
    $region3: #{tpu_custom_call.1} parent=1 // pred_check_branch
      %15 = sbr.rel (0) target = $region5
    $region4: #{tpu_custom_call.1} parent=1 // pred_region
      %s17 = ssub.s32 2048, 2048
      %18 = vsyncadd [#allocation3], %s17
      %s19 = sshll.u32 [#allocation2], 4
      %s20 = int_to_ptr.vmem [resolvable:$true] %s19
      %25 = dma.hbm_to_vmem [thread:$0]  %s0, 2048, %s20, [#allocation3], 1024, 1024, 64
    $region5: #{tpu_custom_call.1} parent=1 // pred_fallthru
      _
    // Predicated region
    $region6: #{tpu_custom_call.1} parent=1 // pred_check
      _
    $region7: #{tpu_custom_call.1} parent=1 // pred_check_branch
      %27 = sbr.rel (0) target = $region9
    $region8: #{tpu_custom_call.1} parent=1 // pred_region
      %s29 = ssub.s32 8192, 8192
      %30 = vsyncadd [#allocation6], %s29
      %s31 = sshll.u32 [#allocation5], 4
      %s32 = int_to_ptr.vmem [resolvable:$true] %s31
      %37 = dma.hbm_to_vmem [thread:$0]  %s1, 8192, %s32, [#allocation6], 64, 64, 4
    $region9: #{tpu_custom_call.1} parent=1 // pred_fallthru
      _
    // Predicated region
    $region10: #{tpu_custom_call.1} parent=1 // pred_check
      _
    $region11: #{tpu_custom_call.1} parent=1 // pred_check_branch
      %39 = sbr.rel (0) target = $region13
    $region12: #{tpu_custom_call.1} parent=1 // pred_region
      _
    $region13: #{tpu_custom_call.1} parent=1 // pred_fallthru
      _
    // Predicated region
    $region14: #{tpu_custom_call.1} parent=1 // pred_check
      _
    $region15: #{tpu_custom_call.1} parent=1 // pred_check_branch
      %41 = sbr.rel (0) target = $region17
    $region16: #{tpu_custom_call.1} parent=1 // pred_region
      %s43 = ssub.s32 8192, 8192
      %44 = vsyncadd [#allocation6], %s43
      %s45 = sshll.u32 [#allocation7], 4
      %s46 = int_to_ptr.vmem [resolvable:$true] %s45
      %51 = dma.hbm_to_vmem [thread:$0]  %s3, 8192, %s46, [#allocation6], 512, 512, 32
    $region17: #{tpu_custom_call.1} parent=1 // pred_fallthru
      _
    // Predicated region
    $region18: #{tpu_custom_call.1} parent=1 // pred_check
      _
    $region19: #{tpu_custom_call.1} parent=1 // pred_check_branch
      %53 = sbr.rel (0) target = $region21
    $region20: #{tpu_custom_call.1} parent=1 // pred_region
      %s55 = ssub.s32 128, 128
      %56 = vsyncadd [#allocation9], %s55
      %s58 = sshll.u32 [#allocation8], 4
      %s59 = int_to_ptr.vmem [resolvable:$true] %s58
      %61 = dma.hbm_to_vmem [thread:$0]  %s4, 128, %s59, [#allocation9]
    $region21: #{tpu_custom_call.1} parent=1 // pred_fallthru
      _
    // Predicated region
    $region22: #{tpu_custom_call.1} parent=1 // pred_check
      _
    $region23: #{tpu_custom_call.1} parent=1 // pred_check_branch
      %63 = sbr.rel (0) target = $region25
    $region24: #{tpu_custom_call.1} parent=1 // pred_region
      %64 = dma.done [#allocation3], 2048
    $region25: #{tpu_custom_call.1} parent=1 // pred_fallthru
      _
    // Predicated region
    $region26: #{tpu_custom_call.1} parent=1 // pred_check
      _
    $region27: #{tpu_custom_call.1} parent=1 // pred_check_branch
      %66 = sbr.rel (0) target = $region29
    $region28: #{tpu_custom_call.1} parent=1 // pred_region
      %67 = dma.done [#allocation6], 8192
    $region29: #{tpu_custom_call.1} parent=1 // pred_fallthru
      _
    // Predicated region
    $region30: #{tpu_custom_call.1} parent=1 // pred_check
      _
    $region31: #{tpu_custom_call.1} parent=1 // pred_check_branch
      %69 = sbr.rel (0) target = $region33
    $region32: #{tpu_custom_call.1} parent=1 // pred_region
      %70 = dma.done [#allocation6], 8192
    $region33: #{tpu_custom_call.1} parent=1 // pred_fallthru
      _
    // Predicated region
    $region34: #{tpu_custom_call.1} parent=1 // pred_check
      _
    $region35: #{tpu_custom_call.1} parent=1 // pred_check_branch
      %72 = sbr.rel (0) target = $region37
    $region36: #{tpu_custom_call.1} parent=1 // pred_region
      %73 = dma.done [#allocation9], 128
    $region37: #{tpu_custom_call.1} parent=1 // pred_fallthru
      _
    %v75 = vld [vmem:[#allocation2] sm:$0xff]
    %v76 = vld [vmem:[#allocation2 + $0x8] sm:$0xff]
    %v77 = vld [vmem:[#allocation2 + $0x10] sm:$0xff]
    %v78 = vld [vmem:[#allocation2 + $0x18] sm:$0xff]
    %v79 = vld [vmem:[#allocation2 + $0x20] sm:$0xff]
    %v80 = vld [vmem:[#allocation2 + $0x28] sm:$0xff]
    %v81 = vld [vmem:[#allocation2 + $0x30] sm:$0xff]
    %v82 = vld [vmem:[#allocation2 + $0x38] sm:$0xff]
    %v83 = vld [vmem:[#allocation2 + $0x40] sm:$0xff]
    %v84 = vld [vmem:[#allocation2 + $0x48] sm:$0xff]
    %v85 = vld [vmem:[#allocation2 + $0x50] sm:$0xff]
    %v86 = vld [vmem:[#allocation2 + $0x58] sm:$0xff]
    %v87 = vld [vmem:[#allocation2 + $0x60] sm:$0xff]
    %v88 = vld [vmem:[#allocation2 + $0x68] sm:$0xff]
    %v89 = vld [vmem:[#allocation2 + $0x70] sm:$0xff]
    %v90 = vld [vmem:[#allocation2 + $0x78] sm:$0xff]
    %v91 = vpack.c.bf16 %v83, %v75
    %v92 = vpack.c.bf16 %v84, %v76
    %v93 = vpack.c.bf16 %v85, %v77
    %v94 = vpack.c.bf16 %v86, %v78
    %v95 = vpack.c.bf16 %v87, %v79
    %v96 = vpack.c.bf16 %v88, %v80
    %v97 = vpack.c.bf16 %v89, %v81
    %v98 = vpack.c.bf16 %v90, %v82
    %v99 = vld [vmem:[#allocation5] sm:$0xf]
    %v100 = vld [vmem:[#allocation5 + $0x4] sm:$0xf]
    %v101 = vld [vmem:[#allocation5 + $0x8] sm:$0xf]
    %v102 = vld [vmem:[#allocation5 + $0xc] sm:$0xf]
    %v103 = vld [vmem:[#allocation5 + $0x10] sm:$0xf]
    %v104 = vld [vmem:[#allocation5 + $0x14] sm:$0xf]
    %v105 = vld [vmem:[#allocation5 + $0x18] sm:$0xf]
    %v106 = vld [vmem:[#allocation5 + $0x1c] sm:$0xf]
    %v107 = vld [vmem:[#allocation5 + $0x20] sm:$0xf]
    %v108 = vld [vmem:[#allocation5 + $0x24] sm:$0xf]
    %v109 = vld [vmem:[#allocation5 + $0x28] sm:$0xf]
    %v110 = vld [vmem:[#allocation5 + $0x2c] sm:$0xf]
    %v111 = vld [vmem:[#allocation5 + $0x30] sm:$0xf]
    %v112 = vld [vmem:[#allocation5 + $0x34] sm:$0xf]
    %v113 = vld [vmem:[#allocation5 + $0x38] sm:$0xf]
    %v114 = vld [vmem:[#allocation5 + $0x3c] sm:$0xf]
    %v115 = vld [vmem:[#allocation5 + $0x40] sm:$0xf]
    %v116 = vld [vmem:[#allocation5 + $0x44] sm:$0xf]
    %v117 = vld [vmem:[#allocation5 + $0x48] sm:$0xf]
    %v118 = vld [vmem:[#allocation5 + $0x4c] sm:$0xf]
    %v119 = vld [vmem:[#allocation5 + $0x50] sm:$0xf]
    %v120 = vld [vmem:[#allocation5 + $0x54] sm:$0xf]
    %v121 = vld [vmem:[#allocation5 + $0x58] sm:$0xf]
    %v122 = vld [vmem:[#allocation5 + $0x5c] sm:$0xf]
    %v123 = vld [vmem:[#allocation5 + $0x60] sm:$0xf]
    %v124 = vld [vmem:[#allocation5 + $0x64] sm:$0xf]
    %v125 = vld [vmem:[#allocation5 + $0x68] sm:$0xf]
    %v126 = vld [vmem:[#allocation5 + $0x6c] sm:$0xf]
    %v127 = vld [vmem:[#allocation5 + $0x70] sm:$0xf]
    %v128 = vld [vmem:[#allocation5 + $0x74] sm:$0xf]
    %v129 = vld [vmem:[#allocation5 + $0x78] sm:$0xf]
    %v130 = vld [vmem:[#allocation5 + $0x7c] sm:$0xf]
    %v131 = vld [vmem:[#allocation5 + $0x80] sm:$0xf]
    %v132 = vld [vmem:[#allocation5 + $0x84] sm:$0xf]
    %v133 = vld [vmem:[#allocation5 + $0x88] sm:$0xf]
    %v134 = vld [vmem:[#allocation5 + $0x8c] sm:$0xf]
    %v135 = vld [vmem:[#allocation5 + $0x90] sm:$0xf]
    %v136 = vld [vmem:[#allocation5 + $0x94] sm:$0xf]
    %v137 = vld [vmem:[#allocation5 + $0x98] sm:$0xf]
    %v138 = vld [vmem:[#allocation5 + $0x9c] sm:$0xf]
    %v139 = vld [vmem:[#allocation5 + $0xa0] sm:$0xf]
    %v140 = vld [vmem:[#allocation5 + $0xa4] sm:$0xf]
    %v141 = vld [vmem:[#allocation5 + $0xa8] sm:$0xf]
    %v142 = vld [vmem:[#allocation5 + $0xac] sm:$0xf]
    %v143 = vld [vmem:[#allocation5 + $0xb0] sm:$0xf]
    %v144 = vld [vmem:[#allocation5 + $0xb4] sm:$0xf]
    %v145 = vld [vmem:[#allocation5 + $0xb8] sm:$0xf]
    %v146 = vld [vmem:[#allocation5 + $0xbc] sm:$0xf]
    %v147 = vld [vmem:[#allocation5 + $0xc0] sm:$0xf]
    %v148 = vld [vmem:[#allocation5 + $0xc4] sm:$0xf]
    %v149 = vld [vmem:[#allocation5 + $0xc8] sm:$0xf]
    %v150 = vld [vmem:[#allocation5 + $0xcc] sm:$0xf]
    %v151 = vld [vmem:[#allocation5 + $0xd0] sm:$0xf]
    %v152 = vld [vmem:[#allocation5 + $0xd4] sm:$0xf]
    %v153 = vld [vmem:[#allocation5 + $0xd8] sm:$0xf]
    %v154 = vld [vmem:[#allocation5 + $0xdc] sm:$0xf]
    %v155 = vld [vmem:[#allocation5 + $0xe0] sm:$0xf]
    %v156 = vld [vmem:[#allocation5 + $0xe4] sm:$0xf]
    %v157 = vld [vmem:[#allocation5 + $0xe8] sm:$0xf]
    %v158 = vld [vmem:[#allocation5 + $0xec] sm:$0xf]
    %v159 = vld [vmem:[#allocation5 + $0xf0] sm:$0xf]
    %v160 = vld [vmem:[#allocation5 + $0xf4] sm:$0xf]
    %v161 = vld [vmem:[#allocation5 + $0xf8] sm:$0xf]
    %v162 = vld [vmem:[#allocation5 + $0xfc] sm:$0xf]
    %v163 = vld [vmem:[#allocation5 + $0x100] sm:$0xf]
    %v164 = vld [vmem:[#allocation5 + $0x104] sm:$0xf]
    %v165 = vld [vmem:[#allocation5 + $0x108] sm:$0xf]
    %v166 = vld [vmem:[#allocation5 + $0x10c] sm:$0xf]
    %v167 = vld [vmem:[#allocation5 + $0x110] sm:$0xf]
    %v168 = vld [vmem:[#allocation5 + $0x114] sm:$0xf]
    %v169 = vld [vmem:[#allocation5 + $0x118] sm:$0xf]
    %v170 = vld [vmem:[#allocation5 + $0x11c] sm:$0xf]
    %v171 = vld [vmem:[#allocation5 + $0x120] sm:$0xf]
    %v172 = vld [vmem:[#allocation5 + $0x124] sm:$0xf]
    %v173 = vld [vmem:[#allocation5 + $0x128] sm:$0xf]
    %v174 = vld [vmem:[#allocation5 + $0x12c] sm:$0xf]
    %v175 = vld [vmem:[#allocation5 + $0x130] sm:$0xf]
    %v176 = vld [vmem:[#allocation5 + $0x134] sm:$0xf]
    %v177 = vld [vmem:[#allocation5 + $0x138] sm:$0xf]
    %v178 = vld [vmem:[#allocation5 + $0x13c] sm:$0xf]
    %v179 = vld [vmem:[#allocation5 + $0x140] sm:$0xf]
    %v180 = vld [vmem:[#allocation5 + $0x144] sm:$0xf]
    %v181 = vld [vmem:[#allocation5 + $0x148] sm:$0xf]
    %v182 = vld [vmem:[#allocation5 + $0x14c] sm:$0xf]
    %v183 = vld [vmem:[#allocation5 + $0x150] sm:$0xf]
    %v184 = vld [vmem:[#allocation5 + $0x154] sm:$0xf]
    %v185 = vld [vmem:[#allocation5 + $0x158] sm:$0xf]
    %v186 = vld [vmem:[#allocation5 + $0x15c] sm:$0xf]
    %v187 = vld [vmem:[#allocation5 + $0x160] sm:$0xf]
    %v188 = vld [vmem:[#allocation5 + $0x164] sm:$0xf]
    %v189 = vld [vmem:[#allocation5 + $0x168] sm:$0xf]
    %v190 = vld [vmem:[#allocation5 + $0x16c] sm:$0xf]
    %v191 = vld [vmem:[#allocation5 + $0x170] sm:$0xf]
    %v192 = vld [vmem:[#allocation5 + $0x174] sm:$0xf]
    %v193 = vld [vmem:[#allocation5 + $0x178] sm:$0xf]
    %v194 = vld [vmem:[#allocation5 + $0x17c] sm:$0xf]
    %v195 = vld [vmem:[#allocation5 + $0x180] sm:$0xf]
    %v196 = vld [vmem:[#allocation5 + $0x184] sm:$0xf]
    %v197 = vld [vmem:[#allocation5 + $0x188] sm:$0xf]
    %v198 = vld [vmem:[#allocation5 + $0x18c] sm:$0xf]
    %v199 = vld [vmem:[#allocation5 + $0x190] sm:$0xf]
    %v200 = vld [vmem:[#allocation5 + $0x194] sm:$0xf]
    %v201 = vld [vmem:[#allocation5 + $0x198] sm:$0xf]
    %v202 = vld [vmem:[#allocation5 + $0x19c] sm:$0xf]
    %v203 = vld [vmem:[#allocation5 + $0x1a0] sm:$0xf]
    %v204 = vld [vmem:[#allocation5 + $0x1a4] sm:$0xf]
    %v205 = vld [vmem:[#allocation5 + $0x1a8] sm:$0xf]
    %v206 = vld [vmem:[#allocation5 + $0x1ac] sm:$0xf]
    %v207 = vld [vmem:[#allocation5 + $0x1b0] sm:$0xf]
    %v208 = vld [vmem:[#allocation5 + $0x1b4] sm:$0xf]
    %v209 = vld [vmem:[#allocation5 + $0x1b8] sm:$0xf]
    %v210 = vld [vmem:[#allocation5 + $0x1bc] sm:$0xf]
    %v211 = vld [vmem:[#allocation5 + $0x1c0] sm:$0xf]
    %v212 = vld [vmem:[#allocation5 + $0x1c4] sm:$0xf]
    %v213 = vld [vmem:[#allocation5 + $0x1c8] sm:$0xf]
    %v214 = vld [vmem:[#allocation5 + $0x1cc] sm:$0xf]
    %v215 = vld [vmem:[#allocation5 + $0x1d0] sm:$0xf]
    %v216 = vld [vmem:[#allocation5 + $0x1d4] sm:$0xf]
    %v217 = vld [vmem:[#allocation5 + $0x1d8] sm:$0xf]
    %v218 = vld [vmem:[#allocation5 + $0x1dc] sm:$0xf]
    %v219 = vld [vmem:[#allocation5 + $0x1e0] sm:$0xf]
    %v220 = vld [vmem:[#allocation5 + $0x1e4] sm:$0xf]
    %v221 = vld [vmem:[#allocation5 + $0x1e8] sm:$0xf]
    %v222 = vld [vmem:[#allocation5 + $0x1ec] sm:$0xf]
    %v223 = vld [vmem:[#allocation5 + $0x1f0] sm:$0xf]
    %v224 = vld [vmem:[#allocation5 + $0x1f4] sm:$0xf]
    %v225 = vld [vmem:[#allocation5 + $0x1f8] sm:$0xf]
    %v226 = vld [vmem:[#allocation5 + $0x1fc] sm:$0xf]
    %v227 = vld [vmem:[%s2] sm:$0x1]
    %v229 = vlaneseq
    %v230 = vshrl.u32 %v229, 7
    %v231 = vsub.s32 0, %v230
    %v232 = vrot.slane %v227, %v231
    %v362 = vunpack.c.l.b16 %v99
    %v363 = vunpack.c.l.b16 %v100
    %v364 = vunpack.c.l.b16 %v101
    %v365 = vunpack.c.l.b16 %v102
    %v366 = vunpack.c.l.b16 %v103
    %v367 = vunpack.c.l.b16 %v104
    %v368 = vunpack.c.l.b16 %v105
    %v369 = vunpack.c.l.b16 %v106
    %v370 = vunpack.c.l.b16 %v107
    %v371 = vunpack.c.l.b16 %v108
    %v372 = vunpack.c.l.b16 %v109
    %v373 = vunpack.c.l.b16 %v110
    %v374 = vunpack.c.l.b16 %v111
    %v375 = vunpack.c.l.b16 %v112
    %v376 = vunpack.c.l.b16 %v113
    %v377 = vunpack.c.l.b16 %v114
    %v378 = vunpack.c.l.b16 %v115
    %v379 = vunpack.c.l.b16 %v116
    %v380 = vunpack.c.l.b16 %v117
    %v381 = vunpack.c.l.b16 %v118
    %v382 = vunpack.c.l.b16 %v119
    %v383 = vunpack.c.l.b16 %v120
    %v384 = vunpack.c.l.b16 %v121
    %v385 = vunpack.c.l.b16 %v122
    %v386 = vunpack.c.l.b16 %v123
    %v387 = vunpack.c.l.b16 %v124
    %v388 = vunpack.c.l.b16 %v125
    %v389 = vunpack.c.l.b16 %v126
    %v390 = vunpack.c.l.b16 %v127
    %v391 = vunpack.c.l.b16 %v128
    %v392 = vunpack.c.l.b16 %v129
    %v393 = vunpack.c.l.b16 %v130
    %v394 = vunpack.c.l.b16 %v131
    %v395 = vunpack.c.l.b16 %v132
    %v396 = vunpack.c.l.b16 %v133
    %v397 = vunpack.c.l.b16 %v134
    %v398 = vunpack.c.l.b16 %v135
    %v399 = vunpack.c.l.b16 %v136
    %v400 = vunpack.c.l.b16 %v137
    %v401 = vunpack.c.l.b16 %v138
    %v402 = vunpack.c.l.b16 %v139
    %v403 = vunpack.c.l.b16 %v140
    %v404 = vunpack.c.l.b16 %v141
    %v405 = vunpack.c.l.b16 %v142
    %v406 = vunpack.c.l.b16 %v143
    %v407 = vunpack.c.l.b16 %v144
    %v408 = vunpack.c.l.b16 %v145
    %v409 = vunpack.c.l.b16 %v146
    %v410 = vunpack.c.l.b16 %v147
    %v411 = vunpack.c.l.b16 %v148
    %v412 = vunpack.c.l.b16 %v149
    %v413 = vunpack.c.l.b16 %v150
    %v414 = vunpack.c.l.b16 %v151
    %v415 = vunpack.c.l.b16 %v152
    %v416 = vunpack.c.l.b16 %v153
    %v417 = vunpack.c.l.b16 %v154
    %v418 = vunpack.c.l.b16 %v155
    %v419 = vunpack.c.l.b16 %v156
    %v420 = vunpack.c.l.b16 %v157
    %v421 = vunpack.c.l.b16 %v158
    %v422 = vunpack.c.l.b16 %v159
    %v423 = vunpack.c.l.b16 %v160
    %v424 = vunpack.c.l.b16 %v161
    %v425 = vunpack.c.l.b16 %v162
    %v426 = vunpack.c.l.b16 %v163
    %v427 = vunpack.c.l.b16 %v164
    %v428 = vunpack.c.l.b16 %v165
    %v429 = vunpack.c.l.b16 %v166
    %v430 = vunpack.c.l.b16 %v167
    %v431 = vunpack.c.l.b16 %v168
    %v432 = vunpack.c.l.b16 %v169
    %v433 = vunpack.c.l.b16 %v170
    %v434 = vunpack.c.l.b16 %v171
    %v435 = vunpack.c.l.b16 %v172
    %v436 = vunpack.c.l.b16 %v173
    %v437 = vunpack.c.l.b16 %v174
    %v438 = vunpack.c.l.b16 %v175
    %v439 = vunpack.c.l.b16 %v176
    %v440 = vunpack.c.l.b16 %v177
    %v441 = vunpack.c.l.b16 %v178
    %v442 = vunpack.c.l.b16 %v179
    %v443 = vunpack.c.l.b16 %v180
    %v444 = vunpack.c.l.b16 %v181
    %v445 = vunpack.c.l.b16 %v182
    %v446 = vunpack.c.l.b16 %v183
    %v447 = vunpack.c.l.b16 %v184
    %v448 = vunpack.c.l.b16 %v185
    %v449 = vunpack.c.l.b16 %v186
    %v450 = vunpack.c.l.b16 %v187
    %v451 = vunpack.c.l.b16 %v188
    %v452 = vunpack.c.l.b16 %v189
    %v453 = vunpack.c.l.b16 %v190
    %v454 = vunpack.c.l.b16 %v191
    %v455 = vunpack.c.l.b16 %v192
    %v456 = vunpack.c.l.b16 %v193
    %v457 = vunpack.c.l.b16 %v194
    %v458 = vunpack.c.l.b16 %v195
    %v459 = vunpack.c.l.b16 %v196
    %v460 = vunpack.c.l.b16 %v197
    %v461 = vunpack.c.l.b16 %v198
    %v462 = vunpack.c.l.b16 %v199
    %v463 = vunpack.c.l.b16 %v200
    %v464 = vunpack.c.l.b16 %v201
    %v465 = vunpack.c.l.b16 %v202
    %v466 = vunpack.c.l.b16 %v203
    %v467 = vunpack.c.l.b16 %v204
    %v468 = vunpack.c.l.b16 %v205
    %v469 = vunpack.c.l.b16 %v206
    %v470 = vunpack.c.l.b16 %v207
    %v471 = vunpack.c.l.b16 %v208
    %v472 = vunpack.c.l.b16 %v209
    %v473 = vunpack.c.l.b16 %v210
    %v474 = vunpack.c.l.b16 %v211
    %v475 = vunpack.c.l.b16 %v212
    %v476 = vunpack.c.l.b16 %v213
    %v477 = vunpack.c.l.b16 %v214
    %v478 = vunpack.c.l.b16 %v215
    %v479 = vunpack.c.l.b16 %v216
    %v480 = vunpack.c.l.b16 %v217
    %v481 = vunpack.c.l.b16 %v218
    %v482 = vunpack.c.l.b16 %v219
    %v483 = vunpack.c.l.b16 %v220
    %v484 = vunpack.c.l.b16 %v221
    %v485 = vunpack.c.l.b16 %v222
    %v486 = vunpack.c.l.b16 %v223
    %v487 = vunpack.c.l.b16 %v224
    %v488 = vunpack.c.l.b16 %v225
    %v489 = vunpack.c.l.b16 %v226
    %v490 = vpack.c.b16 %v363, %v362
    %v491 = vpack.c.b16 %v365, %v364
    %v492 = vpack.c.b16 %v367, %v366
    %v493 = vpack.c.b16 %v369, %v368
    %v494 = vpack.c.b16 %v371, %v370
    %v495 = vpack.c.b16 %v373, %v372
    %v496 = vpack.c.b16 %v375, %v374
    %v497 = vpack.c.b16 %v377, %v376
    %v498 = vpack.c.b16 %v379, %v378
    %v499 = vpack.c.b16 %v381, %v380
    %v500 = vpack.c.b16 %v383, %v382
    %v501 = vpack.c.b16 %v385, %v384
    %v502 = vpack.c.b16 %v387, %v386
    %v503 = vpack.c.b16 %v389, %v388
    %v504 = vpack.c.b16 %v391, %v390
    %v505 = vpack.c.b16 %v393, %v392
    %v506 = vpack.c.b16 %v395, %v394
    %v507 = vpack.c.b16 %v397, %v396
    %v508 = vpack.c.b16 %v399, %v398
    %v509 = vpack.c.b16 %v401, %v400
    %v510 = vpack.c.b16 %v403, %v402
    %v511 = vpack.c.b16 %v405, %v404
    %v512 = vpack.c.b16 %v407, %v406
    %v513 = vpack.c.b16 %v409, %v408
    %v514 = vpack.c.b16 %v411, %v410
    %v515 = vpack.c.b16 %v413, %v412
    %v516 = vpack.c.b16 %v415, %v414
    %v517 = vpack.c.b16 %v417, %v416
    %v518 = vpack.c.b16 %v419, %v418
    %v519 = vpack.c.b16 %v421, %v420
    %v520 = vpack.c.b16 %v423, %v422
    %v521 = vpack.c.b16 %v425, %v424
    %v522 = vpack.c.b16 %v427, %v426
    %v523 = vpack.c.b16 %v429, %v428
    %v524 = vpack.c.b16 %v431, %v430
    %v525 = vpack.c.b16 %v433, %v432
    %v526 = vpack.c.b16 %v435, %v434
    %v527 = vpack.c.b16 %v437, %v436
    %v528 = vpack.c.b16 %v439, %v438
    %v529 = vpack.c.b16 %v441, %v440
    %v530 = vpack.c.b16 %v443, %v442
    %v531 = vpack.c.b16 %v445, %v444
    %v532 = vpack.c.b16 %v447, %v446
    %v533 = vpack.c.b16 %v449, %v448
    %v534 = vpack.c.b16 %v451, %v450
    %v535 = vpack.c.b16 %v453, %v452
    %v536 = vpack.c.b16 %v455, %v454
    %v537 = vpack.c.b16 %v457, %v456
    %v538 = vpack.c.b16 %v459, %v458
    %v539 = vpack.c.b16 %v461, %v460
    %v540 = vpack.c.b16 %v463, %v462
    %v541 = vpack.c.b16 %v465, %v464
    %v542 = vpack.c.b16 %v467, %v466
    %v543 = vpack.c.b16 %v469, %v468
    %v544 = vpack.c.b16 %v471, %v470
    %v545 = vpack.c.b16 %v473, %v472
    %v546 = vpack.c.b16 %v475, %v474
    %v547 = vpack.c.b16 %v477, %v476
    %v548 = vpack.c.b16 %v479, %v478
    %v549 = vpack.c.b16 %v481, %v480
    %v550 = vpack.c.b16 %v483, %v482
    %v551 = vpack.c.b16 %v485, %v484
    %v552 = vpack.c.b16 %v487, %v486
    %v553 = vpack.c.b16 %v489, %v488
    %618 = vmatprep.subr.bf16.mxu0 0
    %619 = vmatpush1.bf16.msra.mxu0 %v497
    %620 = vmatprep.subr.bf16.mxu0 0
    %621 = vmatpush1.bf16.msra.mxu0 %v496
    %622 = vmatprep.subr.bf16.mxu0 0
    %623 = vmatpush1.bf16.msra.mxu0 %v495
    %624 = vmatprep.subr.bf16.mxu0 0
    %625 = vmatpush1.bf16.msra.mxu0 %v494
    %626 = vmatprep.subr.bf16.mxu0 0
    %627 = vmatpush1.bf16.msra.mxu0 %v493
    %628 = vmatprep.subr.bf16.mxu0 0
    %629 = vmatpush1.bf16.msra.mxu0 %v492
    %630 = vmatprep.subr.bf16.mxu0 0
    %631 = vmatpush1.bf16.msra.mxu0 %v491
    %632 = vmatprep.subr.bf16.mxu0 0
    %633 = vmatpush1.bf16.msra.mxu0 %v490
    %634 = vmatprep.subr.bf16.mxu0 0
    %635 = vmatpush2.bf16.msra.mxu0 %v505
    %636 = vmatprep.subr.bf16.mxu0 0
    %637 = vmatpush2.bf16.msra.mxu0 %v504
    %638 = vmatprep.subr.bf16.mxu0 0
    %639 = vmatpush2.bf16.msra.mxu0 %v503
    %640 = vmatprep.subr.bf16.mxu0 0
    %641 = vmatpush2.bf16.msra.mxu0 %v502
    %642 = vmatprep.subr.bf16.mxu0 0
    %643 = vmatpush2.bf16.msra.mxu0 %v501
    %644 = vmatprep.subr.bf16.mxu0 0
    %645 = vmatpush2.bf16.msra.mxu0 %v500
    %646 = vmatprep.subr.bf16.mxu0 0
    %647 = vmatpush2.bf16.msra.mxu0 %v499
    %648 = vmatprep.subr.bf16.mxu0 0
    %649 = vmatpush2.bf16.msra.mxu0 %v498
    %650 = vmatprep.mubr.bf16.mxu0 %v92
    %651 = vmatmul.mubr.bf16.gmra.mxu0 %v91
    %v652 = vpop.f32.mrf.mxu0
    %v653 = vadd.f32 %v232, %v652
    %v654 = vpop.f32.mrf.mxu0
    %v655 = vpop.f32.mrf.mxu0
    %v656 = vadd.f32 %v232, %v655
    %v657 = vpop.f32.mrf.mxu0
    %658 = vdwg.mxu0
    %659 = vmatprep.subr.bf16.mxu0 0
    %660 = vmatpush1.bf16.msra.mxu0 %v513
    %661 = vmatprep.subr.bf16.mxu0 0
    %662 = vmatpush1.bf16.msra.mxu0 %v512
    %663 = vmatprep.subr.bf16.mxu0 0
    %664 = vmatpush1.bf16.msra.mxu0 %v511
    %665 = vmatprep.subr.bf16.mxu0 0
    %666 = vmatpush1.bf16.msra.mxu0 %v510
    %667 = vmatprep.subr.bf16.mxu0 0
    %668 = vmatpush1.bf16.msra.mxu0 %v509
    %669 = vmatprep.subr.bf16.mxu0 0
    %670 = vmatpush1.bf16.msra.mxu0 %v508
    %671 = vmatprep.subr.bf16.mxu0 0
    %672 = vmatpush1.bf16.msra.mxu0 %v507
    %673 = vmatprep.subr.bf16.mxu0 0
    %674 = vmatpush1.bf16.msra.mxu0 %v506
    %675 = vmatprep.subr.bf16.mxu0 0
    %676 = vmatpush2.bf16.msra.mxu0 %v521
    %677 = vmatprep.subr.bf16.mxu0 0
    %678 = vmatpush2.bf16.msra.mxu0 %v520
    %679 = vmatprep.subr.bf16.mxu0 0
    %680 = vmatpush2.bf16.msra.mxu0 %v519
    %681 = vmatprep.subr.bf16.mxu0 0
    %682 = vmatpush2.bf16.msra.mxu0 %v518
    %683 = vmatprep.subr.bf16.mxu0 0
    %684 = vmatpush2.bf16.msra.mxu0 %v517
    %685 = vmatprep.subr.bf16.mxu0 0
    %686 = vmatpush2.bf16.msra.mxu0 %v516
    %687 = vmatprep.subr.bf16.mxu0 0
    %688 = vmatpush2.bf16.msra.mxu0 %v515
    %689 = vmatprep.subr.bf16.mxu0 0
    %690 = vmatpush2.bf16.msra.mxu0 %v514
    %691 = vmatprep.mubr.bf16.mxu0 %v94
    %692 = vmatmul.mubr.bf16.gmra.mxu0 %v93
    %v693 = vpop.f32.mrf.mxu0
    %v694 = vadd.f32 %v653, %v693
    %v695 = vpop.f32.mrf.mxu0
    %v696 = vpop.f32.mrf.mxu0
    %v697 = vadd.f32 %v656, %v696
    %v698 = vpop.f32.mrf.mxu0
    %699 = vdwg.mxu0
    %700 = vmatprep.subr.bf16.mxu0 0
    %701 = vmatpush1.bf16.msra.mxu0 %v529
    %702 = vmatprep.subr.bf16.mxu0 0
    %703 = vmatpush1.bf16.msra.mxu0 %v528
    %704 = vmatprep.subr.bf16.mxu0 0
    %705 = vmatpush1.bf16.msra.mxu0 %v527
    %706 = vmatprep.subr.bf16.mxu0 0
    %707 = vmatpush1.bf16.msra.mxu0 %v526
    %708 = vmatprep.subr.bf16.mxu0 0
    %709 = vmatpush1.bf16.msra.mxu0 %v525
    %710 = vmatprep.subr.bf16.mxu0 0
    %711 = vmatpush1.bf16.msra.mxu0 %v524
    %712 = vmatprep.subr.bf16.mxu0 0
    %713 = vmatpush1.bf16.msra.mxu0 %v523
    %714 = vmatprep.subr.bf16.mxu0 0
    %715 = vmatpush1.bf16.msra.mxu0 %v522
    %716 = vmatprep.subr.bf16.mxu0 0
    %717 = vmatpush2.bf16.msra.mxu0 %v537
    %718 = vmatprep.subr.bf16.mxu0 0
    %719 = vmatpush2.bf16.msra.mxu0 %v536
    %720 = vmatprep.subr.bf16.mxu0 0
    %721 = vmatpush2.bf16.msra.mxu0 %v535
    %722 = vmatprep.subr.bf16.mxu0 0
    %723 = vmatpush2.bf16.msra.mxu0 %v534
    %724 = vmatprep.subr.bf16.mxu0 0
    %725 = vmatpush2.bf16.msra.mxu0 %v533
    %726 = vmatprep.subr.bf16.mxu0 0
    %727 = vmatpush2.bf16.msra.mxu0 %v532
    %728 = vmatprep.subr.bf16.mxu0 0
    %729 = vmatpush2.bf16.msra.mxu0 %v531
    %730 = vmatprep.subr.bf16.mxu0 0
    %731 = vmatpush2.bf16.msra.mxu0 %v530
    %732 = vmatprep.mubr.bf16.mxu0 %v96
    %733 = vmatmul.mubr.bf16.gmra.mxu0 %v95
    %v734 = vpop.f32.mrf.mxu0
    %v735 = vadd.f32 %v694, %v734
    %v736 = vpop.f32.mrf.mxu0
    %v737 = vpop.f32.mrf.mxu0
    %v738 = vadd.f32 %v697, %v737
    %v739 = vpop.f32.mrf.mxu0
    %740 = vdwg.mxu0
    %741 = vmatprep.subr.bf16.mxu0 0
    %742 = vmatpush1.bf16.msra.mxu0 %v545
    %743 = vmatprep.subr.bf16.mxu0 0
    %744 = vmatpush1.bf16.msra.mxu0 %v544
    %745 = vmatprep.subr.bf16.mxu0 0
    %746 = vmatpush1.bf16.msra.mxu0 %v543
    %747 = vmatprep.subr.bf16.mxu0 0
    %748 = vmatpush1.bf16.msra.mxu0 %v542
    %749 = vmatprep.subr.bf16.mxu0 0
    %750 = vmatpush1.bf16.msra.mxu0 %v541
    %751 = vmatprep.subr.bf16.mxu0 0
    %752 = vmatpush1.bf16.msra.mxu0 %v540
    %753 = vmatprep.subr.bf16.mxu0 0
    %754 = vmatpush1.bf16.msra.mxu0 %v539
    %755 = vmatprep.subr.bf16.mxu0 0
    %756 = vmatpush1.bf16.msra.mxu0 %v538
    %757 = vmatprep.subr.bf16.mxu0 0
    %758 = vmatpush2.bf16.msra.mxu0 %v553
    %759 = vmatprep.subr.bf16.mxu0 0
    %760 = vmatpush2.bf16.msra.mxu0 %v552
    %761 = vmatprep.subr.bf16.mxu0 0
    %762 = vmatpush2.bf16.msra.mxu0 %v551
    %763 = vmatprep.subr.bf16.mxu0 0
    %764 = vmatpush2.bf16.msra.mxu0 %v550
    %765 = vmatprep.subr.bf16.mxu0 0
    %766 = vmatpush2.bf16.msra.mxu0 %v549
    %767 = vmatprep.subr.bf16.mxu0 0
    %768 = vmatpush2.bf16.msra.mxu0 %v548
    %769 = vmatprep.subr.bf16.mxu0 0
    %770 = vmatpush2.bf16.msra.mxu0 %v547
    %771 = vmatprep.subr.bf16.mxu0 0
    %772 = vmatpush2.bf16.msra.mxu0 %v546
    %773 = vmatprep.mubr.bf16.mxu0 %v98
    %774 = vmatmul.mubr.bf16.gmra.mxu0 %v97
    %v775 = vpop.f32.mrf.mxu0
    %v776 = vadd.f32 %v735, %v775
    %v777 = vpop.f32.mrf.mxu0
    %v778 = vpop.f32.mrf.mxu0
    %v779 = vadd.f32 %v738, %v778
    %v780 = vpop.f32.mrf.mxu0
    %781 = vdwg.mxu0
    %v782 = vmax.f32 %v776, 0.0
    %v783 = vmax.f32 %v779, 0.0
    %v784 = vpack.c.bf16 %v783, %v782
    %v785 = vld [vmem:[#allocation7] sm:$0xff]
    %v786 = vld [vmem:[#allocation7 + $0x8] sm:$0xff]
    %v787 = vld [vmem:[#allocation7 + $0x10] sm:$0xff]
    %v788 = vld [vmem:[#allocation7 + $0x18] sm:$0xff]
    %v789 = vld [vmem:[#allocation7 + $0x20] sm:$0xff]
    %v790 = vld [vmem:[#allocation7 + $0x28] sm:$0xff]
    %v791 = vld [vmem:[#allocation7 + $0x30] sm:$0xff]
    %v792 = vld [vmem:[#allocation7 + $0x38] sm:$0xff]
    %v793 = vld [vmem:[#allocation7 + $0x40] sm:$0xff]
    %v794 = vld [vmem:[#allocation7 + $0x48] sm:$0xff]
    %v795 = vld [vmem:[#allocation7 + $0x50] sm:$0xff]
    %v796 = vld [vmem:[#allocation7 + $0x58] sm:$0xff]
    %v797 = vld [vmem:[#allocation7 + $0x60] sm:$0xff]
    %v798 = vld [vmem:[#allocation7 + $0x68] sm:$0xff]
    %v799 = vld [vmem:[#allocation7 + $0x70] sm:$0xff]
    %v800 = vld [vmem:[#allocation7 + $0x78] sm:$0xff]
    %v801 = vld [vmem:[#allocation7 + $0x80] sm:$0xff]
    %v802 = vld [vmem:[#allocation7 + $0x88] sm:$0xff]
    %v803 = vld [vmem:[#allocation7 + $0x90] sm:$0xff]
    %v804 = vld [vmem:[#allocation7 + $0x98] sm:$0xff]
    %v805 = vld [vmem:[#allocation7 + $0xa0] sm:$0xff]
    %v806 = vld [vmem:[#allocation7 + $0xa8] sm:$0xff]
    %v807 = vld [vmem:[#allocation7 + $0xb0] sm:$0xff]
    %v808 = vld [vmem:[#allocation7 + $0xb8] sm:$0xff]
    %v809 = vld [vmem:[#allocation7 + $0xc0] sm:$0xff]
    %v810 = vld [vmem:[#allocation7 + $0xc8] sm:$0xff]
    %v811 = vld [vmem:[#allocation7 + $0xd0] sm:$0xff]
    %v812 = vld [vmem:[#allocation7 + $0xd8] sm:$0xff]
    %v813 = vld [vmem:[#allocation7 + $0xe0] sm:$0xff]
    %v814 = vld [vmem:[#allocation7 + $0xe8] sm:$0xff]
    %v815 = vld [vmem:[#allocation7 + $0xf0] sm:$0xff]
    %v816 = vld [vmem:[#allocation7 + $0xf8] sm:$0xff]
    %v817 = vld [vmem:[#allocation7 + $0x100] sm:$0xff]
    %v818 = vld [vmem:[#allocation7 + $0x108] sm:$0xff]
    %v819 = vld [vmem:[#allocation7 + $0x110] sm:$0xff]
    %v820 = vld [vmem:[#allocation7 + $0x118] sm:$0xff]
    %v821 = vld [vmem:[#allocation7 + $0x120] sm:$0xff]
    %v822 = vld [vmem:[#allocation7 + $0x128] sm:$0xff]
    %v823 = vld [vmem:[#allocation7 + $0x130] sm:$0xff]
    %v824 = vld [vmem:[#allocation7 + $0x138] sm:$0xff]
    %v825 = vld [vmem:[#allocation7 + $0x140] sm:$0xff]
    %v826 = vld [vmem:[#allocation7 + $0x148] sm:$0xff]
    %v827 = vld [vmem:[#allocation7 + $0x150] sm:$0xff]
    %v828 = vld [vmem:[#allocation7 + $0x158] sm:$0xff]
    %v829 = vld [vmem:[#allocation7 + $0x160] sm:$0xff]
    %v830 = vld [vmem:[#allocation7 + $0x168] sm:$0xff]
    %v831 = vld [vmem:[#allocation7 + $0x170] sm:$0xff]
    %v832 = vld [vmem:[#allocation7 + $0x178] sm:$0xff]
    %v833 = vld [vmem:[#allocation7 + $0x180] sm:$0xff]
    %v834 = vld [vmem:[#allocation7 + $0x188] sm:$0xff]
    %v835 = vld [vmem:[#allocation7 + $0x190] sm:$0xff]
    %v836 = vld [vmem:[#allocation7 + $0x198] sm:$0xff]
    %v837 = vld [vmem:[#allocation7 + $0x1a0] sm:$0xff]
    %v838 = vld [vmem:[#allocation7 + $0x1a8] sm:$0xff]
    %v839 = vld [vmem:[#allocation7 + $0x1b0] sm:$0xff]
    %v840 = vld [vmem:[#allocation7 + $0x1b8] sm:$0xff]
    %v841 = vld [vmem:[#allocation7 + $0x1c0] sm:$0xff]
    %v842 = vld [vmem:[#allocation7 + $0x1c8] sm:$0xff]
    %v843 = vld [vmem:[#allocation7 + $0x1d0] sm:$0xff]
    %v844 = vld [vmem:[#allocation7 + $0x1d8] sm:$0xff]
    %v845 = vld [vmem:[#allocation7 + $0x1e0] sm:$0xff]
    %v846 = vld [vmem:[#allocation7 + $0x1e8] sm:$0xff]
    %v847 = vld [vmem:[#allocation7 + $0x1f0] sm:$0xff]
    %v848 = vld [vmem:[#allocation7 + $0x1f8] sm:$0xff]
    %v849 = vld [vmem:[#allocation8] sm:$0xff]
    %v851 = vlaneseq
    %v852 = vshrl.u32 %v851, 7
    %v853 = vsub.s32 0, %v852
    %v854 = vrot.slane %v849, %v853
    %v855 = vlaneseq
    %v856 = vshrl.u32 %v855, 7
    %v857 = vsub.s32 1, %v856
    %v858 = vrot.slane %v849, %v857
    %v859 = vlaneseq
    %v860 = vshrl.u32 %v859, 7
    %v861 = vsub.s32 2, %v860
    %v862 = vrot.slane %v849, %v861
    %v863 = vlaneseq
    %v864 = vshrl.u32 %v863, 7
    %v865 = vsub.s32 3, %v864
    %v866 = vrot.slane %v849, %v865
    %v867 = vlaneseq
    %v868 = vshrl.u32 %v867, 7
    %v869 = vsub.s32 4, %v868
    %v870 = vrot.slane %v849, %v869
    %v871 = vlaneseq
    %v872 = vshrl.u32 %v871, 7
    %v873 = vsub.s32 5, %v872
    %v874 = vrot.slane %v849, %v873
    %v875 = vlaneseq
    %v876 = vshrl.u32 %v875, 7
    %v877 = vsub.s32 6, %v876
    %v878 = vrot.slane %v849, %v877
    %v879 = vlaneseq
    %v880 = vshrl.u32 %v879, 7
    %v881 = vsub.s32 7, %v880
    %v882 = vrot.slane %v849, %v881
    %v955 = vunpack.c.l.b16 %v785
    %v956 = vunpack.c.h.b16 %v785
    %v957 = vunpack.c.l.b16 %v786
    %v958 = vunpack.c.h.b16 %v786
    %v959 = vunpack.c.l.b16 %v787
    %v960 = vunpack.c.h.b16 %v787
    %v961 = vunpack.c.l.b16 %v788
    %v962 = vunpack.c.h.b16 %v788
    %v963 = vunpack.c.l.b16 %v789
    %v964 = vunpack.c.h.b16 %v789
    %v965 = vunpack.c.l.b16 %v790
    %v966 = vunpack.c.h.b16 %v790
    %v967 = vunpack.c.l.b16 %v791
    %v968 = vunpack.c.h.b16 %v791
    %v969 = vunpack.c.l.b16 %v792
    %v970 = vunpack.c.h.b16 %v792
    %v971 = vunpack.c.l.b16 %v793
    %v972 = vunpack.c.h.b16 %v793
    %v973 = vunpack.c.l.b16 %v794
    %v974 = vunpack.c.h.b16 %v794
    %v975 = vunpack.c.l.b16 %v795
    %v976 = vunpack.c.h.b16 %v795
    %v977 = vunpack.c.l.b16 %v796
    %v978 = vunpack.c.h.b16 %v796
    %v979 = vunpack.c.l.b16 %v797
    %v980 = vunpack.c.h.b16 %v797
    %v981 = vunpack.c.l.b16 %v798
    %v982 = vunpack.c.h.b16 %v798
    %v983 = vunpack.c.l.b16 %v799
    %v984 = vunpack.c.h.b16 %v799
    %v985 = vunpack.c.l.b16 %v800
    %v986 = vunpack.c.h.b16 %v800
    %v987 = vunpack.c.l.b16 %v801
    %v988 = vunpack.c.h.b16 %v801
    %v989 = vunpack.c.l.b16 %v802
    %v990 = vunpack.c.h.b16 %v802
    %v991 = vunpack.c.l.b16 %v803
    %v992 = vunpack.c.h.b16 %v803
    %v993 = vunpack.c.l.b16 %v804
    %v994 = vunpack.c.h.b16 %v804
    %v995 = vunpack.c.l.b16 %v805
    %v996 = vunpack.c.h.b16 %v805
    %v997 = vunpack.c.l.b16 %v806
    %v998 = vunpack.c.h.b16 %v806
    %v999 = vunpack.c.l.b16 %v807
    %v1000 = vunpack.c.h.b16 %v807
    %v1001 = vunpack.c.l.b16 %v808
    %v1002 = vunpack.c.h.b16 %v808
    %v1003 = vunpack.c.l.b16 %v809
    %v1004 = vunpack.c.h.b16 %v809
    %v1005 = vunpack.c.l.b16 %v810
    %v1006 = vunpack.c.h.b16 %v810
    %v1007 = vunpack.c.l.b16 %v811
    %v1008 = vunpack.c.h.b16 %v811
    %v1009 = vunpack.c.l.b16 %v812
    %v1010 = vunpack.c.h.b16 %v812
    %v1011 = vunpack.c.l.b16 %v813
    %v1012 = vunpack.c.h.b16 %v813
    %v1013 = vunpack.c.l.b16 %v814
    %v1014 = vunpack.c.h.b16 %v814
    %v1015 = vunpack.c.l.b16 %v815
    %v1016 = vunpack.c.h.b16 %v815
    %v1017 = vunpack.c.l.b16 %v816
    %v1018 = vunpack.c.h.b16 %v816
    %v1019 = vunpack.c.l.b16 %v817
    %v1020 = vunpack.c.h.b16 %v817
    %v1021 = vunpack.c.l.b16 %v818
    %v1022 = vunpack.c.h.b16 %v818
    %v1023 = vunpack.c.l.b16 %v819
    %v1024 = vunpack.c.h.b16 %v819
    %v1025 = vunpack.c.l.b16 %v820
    %v1026 = vunpack.c.h.b16 %v820
    %v1027 = vunpack.c.l.b16 %v821
    %v1028 = vunpack.c.h.b16 %v821
    %v1029 = vunpack.c.l.b16 %v822
    %v1030 = vunpack.c.h.b16 %v822
    %v1031 = vunpack.c.l.b16 %v823
    %v1032 = vunpack.c.h.b16 %v823
    %v1033 = vunpack.c.l.b16 %v824
    %v1034 = vunpack.c.h.b16 %v824
    %v1035 = vunpack.c.l.b16 %v825
    %v1036 = vunpack.c.h.b16 %v825
    %v1037 = vunpack.c.l.b16 %v826
    %v1038 = vunpack.c.h.b16 %v826
    %v1039 = vunpack.c.l.b16 %v827
    %v1040 = vunpack.c.h.b16 %v827
    %v1041 = vunpack.c.l.b16 %v828
    %v1042 = vunpack.c.h.b16 %v828
    %v1043 = vunpack.c.l.b16 %v829
    %v1044 = vunpack.c.h.b16 %v829
    %v1045 = vunpack.c.l.b16 %v830
    %v1046 = vunpack.c.h.b16 %v830
    %v1047 = vunpack.c.l.b16 %v831
    %v1048 = vunpack.c.h.b16 %v831
    %v1049 = vunpack.c.l.b16 %v832
    %v1050 = vunpack.c.h.b16 %v832
    %v1051 = vunpack.c.l.b16 %v833
    %v1052 = vunpack.c.h.b16 %v833
    %v1053 = vunpack.c.l.b16 %v834
    %v1054 = vunpack.c.h.b16 %v834
    %v1055 = vunpack.c.l.b16 %v835
    %v1056 = vunpack.c.h.b16 %v835
    %v1057 = vunpack.c.l.b16 %v836
    %v1058 = vunpack.c.h.b16 %v836
    %v1059 = vunpack.c.l.b16 %v837
    %v1060 = vunpack.c.h.b16 %v837
    %v1061 = vunpack.c.l.b16 %v838
    %v1062 = vunpack.c.h.b16 %v838
    %v1063 = vunpack.c.l.b16 %v839
    %v1064 = vunpack.c.h.b16 %v839
    %v1065 = vunpack.c.l.b16 %v840
    %v1066 = vunpack.c.h.b16 %v840
    %v1067 = vunpack.c.l.b16 %v841
    %v1068 = vunpack.c.h.b16 %v841
    %v1069 = vunpack.c.l.b16 %v842
    %v1070 = vunpack.c.h.b16 %v842
    %v1071 = vunpack.c.l.b16 %v843
    %v1072 = vunpack.c.h.b16 %v843
    %v1073 = vunpack.c.l.b16 %v844
    %v1074 = vunpack.c.h.b16 %v844
    %v1075 = vunpack.c.l.b16 %v845
    %v1076 = vunpack.c.h.b16 %v845
    %v1077 = vunpack.c.l.b16 %v846
    %v1078 = vunpack.c.h.b16 %v846
    %v1079 = vunpack.c.l.b16 %v847
    %v1080 = vunpack.c.h.b16 %v847
    %v1081 = vunpack.c.l.b16 %v848
    %v1082 = vunpack.c.h.b16 %v848
    %v1083 = vpack.c.b16 %v963, %v955
    %v1084 = vpack.c.b16 %v964, %v956
    %v1085 = vpack.c.b16 %v965, %v957
    %v1086 = vpack.c.b16 %v966, %v958
    %v1087 = vpack.c.b16 %v967, %v959
    %v1088 = vpack.c.b16 %v968, %v960
    %v1089 = vpack.c.b16 %v969, %v961
    %v1090 = vpack.c.b16 %v970, %v962
    %v1091 = vpack.c.b16 %v979, %v971
    %v1092 = vpack.c.b16 %v980, %v972
    %v1093 = vpack.c.b16 %v981, %v973
    %v1094 = vpack.c.b16 %v982, %v974
    %v1095 = vpack.c.b16 %v983, %v975
    %v1096 = vpack.c.b16 %v984, %v976
    %v1097 = vpack.c.b16 %v985, %v977
    %v1098 = vpack.c.b16 %v986, %v978
    %v1099 = vpack.c.b16 %v995, %v987
    %v1100 = vpack.c.b16 %v996, %v988
    %v1101 = vpack.c.b16 %v997, %v989
    %v1102 = vpack.c.b16 %v998, %v990
    %v1103 = vpack.c.b16 %v999, %v991
    %v1104 = vpack.c.b16 %v1000, %v992
    %v1105 = vpack.c.b16 %v1001, %v993
    %v1106 = vpack.c.b16 %v1002, %v994
    %v1107 = vpack.c.b16 %v1011, %v1003
    %v1108 = vpack.c.b16 %v1012, %v1004
    %v1109 = vpack.c.b16 %v1013, %v1005
    %v1110 = vpack.c.b16 %v1014, %v1006
    %v1111 = vpack.c.b16 %v1015, %v1007
    %v1112 = vpack.c.b16 %v1016, %v1008
    %v1113 = vpack.c.b16 %v1017, %v1009
    %v1114 = vpack.c.b16 %v1018, %v1010
    %v1115 = vpack.c.b16 %v1027, %v1019
    %v1116 = vpack.c.b16 %v1028, %v1020
    %v1117 = vpack.c.b16 %v1029, %v1021
    %v1118 = vpack.c.b16 %v1030, %v1022
    %v1119 = vpack.c.b16 %v1031, %v1023
    %v1120 = vpack.c.b16 %v1032, %v1024
    %v1121 = vpack.c.b16 %v1033, %v1025
    %v1122 = vpack.c.b16 %v1034, %v1026
    %v1123 = vpack.c.b16 %v1043, %v1035
    %v1124 = vpack.c.b16 %v1044, %v1036
    %v1125 = vpack.c.b16 %v1045, %v1037
    %v1126 = vpack.c.b16 %v1046, %v1038
    %v1127 = vpack.c.b16 %v1047, %v1039
    %v1128 = vpack.c.b16 %v1048, %v1040
    %v1129 = vpack.c.b16 %v1049, %v1041
    %v1130 = vpack.c.b16 %v1050, %v1042
    %v1131 = vpack.c.b16 %v1059, %v1051
    %v1132 = vpack.c.b16 %v1060, %v1052
    %v1133 = vpack.c.b16 %v1061, %v1053
    %v1134 = vpack.c.b16 %v1062, %v1054
    %v1135 = vpack.c.b16 %v1063, %v1055
    %v1136 = vpack.c.b16 %v1064, %v1056
    %v1137 = vpack.c.b16 %v1065, %v1057
    %v1138 = vpack.c.b16 %v1066, %v1058
    %v1139 = vpack.c.b16 %v1075, %v1067
    %v1140 = vpack.c.b16 %v1076, %v1068
    %v1141 = vpack.c.b16 %v1077, %v1069
    %v1142 = vpack.c.b16 %v1078, %v1070
    %v1143 = vpack.c.b16 %v1079, %v1071
    %v1144 = vpack.c.b16 %v1080, %v1072
    %v1145 = vpack.c.b16 %v1081, %v1073
    %v1146 = vpack.c.b16 %v1082, %v1074
    %1211 = vmatprep.subr.bf16.mxu0 %v1140
    %1212 = vmatpush1.bf16.msra.mxu0 %v1139
    %1213 = vmatprep.subr.bf16.mxu0 %v1132
    %1214 = vmatpush1.bf16.msra.mxu0 %v1131
    %1215 = vmatprep.subr.bf16.mxu0 %v1124
    %1216 = vmatpush1.bf16.msra.mxu0 %v1123
    %1217 = vmatprep.subr.bf16.mxu0 %v1116
    %1218 = vmatpush1.bf16.msra.mxu0 %v1115
    %1219 = vmatprep.subr.bf16.mxu0 %v1108
    %1220 = vmatpush1.bf16.msra.mxu0 %v1107
    %1221 = vmatprep.subr.bf16.mxu0 %v1100
    %1222 = vmatpush1.bf16.msra.mxu0 %v1099
    %1223 = vmatprep.subr.bf16.mxu0 %v1092
    %1224 = vmatpush1.bf16.msra.mxu0 %v1091
    %1225 = vmatprep.subr.bf16.mxu0 %v1084
    %1226 = vmatpush1.bf16.msra.mxu0 %v1083
    %1227 = vmatprep.subr.bf16.mxu0 0
    %1228 = vmatpush2.bf16.msra.mxu0 0
    %1229 = vmatprep.subr.bf16.mxu0 0
    %1230 = vmatpush2.bf16.msra.mxu0 0
    %1231 = vmatprep.subr.bf16.mxu0 0
    %1232 = vmatpush2.bf16.msra.mxu0 0
    %1233 = vmatprep.subr.bf16.mxu0 0
    %1234 = vmatpush2.bf16.msra.mxu0 0
    %1235 = vmatprep.subr.bf16.mxu0 0
    %1236 = vmatpush2.bf16.msra.mxu0 0
    %1237 = vmatprep.subr.bf16.mxu0 0
    %1238 = vmatpush2.bf16.msra.mxu0 0
    %1239 = vmatprep.subr.bf16.mxu0 0
    %1240 = vmatpush2.bf16.msra.mxu0 0
    %1241 = vmatprep.subr.bf16.mxu0 0
    %1242 = vmatpush2.bf16.msra.mxu0 0
    %1243 = vmatprep.mubr.bf16.mxu0 0
    %1244 = vmatmul.mubr.bf16.gmra.mxu0 %v784
    %v1245 = vpop.f32.mrf.mxu0
    %v1246 = vadd.f32 %v854, %v1245
    %v1247 = vpop.f32.mrf.mxu0
    %v1248 = vadd.f32 %v858, %v1247
    %v1249 = vpop.f32.mrf.mxu0
    %v1250 = vadd.f32 %v854, %v1249
    %v1251 = vpop.f32.mrf.mxu0
    %v1252 = vadd.f32 %v858, %v1251
    %1253 = vdwg.mxu0
    %1254 = vmatprep.subr.bf16.mxu0 %v1142
    %1255 = vmatpush1.bf16.msra.mxu0 %v1141
    %1256 = vmatprep.subr.bf16.mxu0 %v1134
    %1257 = vmatpush1.bf16.msra.mxu0 %v1133
    %1258 = vmatprep.subr.bf16.mxu0 %v1126
    %1259 = vmatpush1.bf16.msra.mxu0 %v1125
    %1260 = vmatprep.subr.bf16.mxu0 %v1118
    %1261 = vmatpush1.bf16.msra.mxu0 %v1117
    %1262 = vmatprep.subr.bf16.mxu0 %v1110
    %1263 = vmatpush1.bf16.msra.mxu0 %v1109
    %1264 = vmatprep.subr.bf16.mxu0 %v1102
    %1265 = vmatpush1.bf16.msra.mxu0 %v1101
    %1266 = vmatprep.subr.bf16.mxu0 %v1094
    %1267 = vmatpush1.bf16.msra.mxu0 %v1093
    %1268 = vmatprep.subr.bf16.mxu0 %v1086
    %1269 = vmatpush1.bf16.msra.mxu0 %v1085
    %1270 = vmatprep.subr.bf16.mxu0 0
    %1271 = vmatpush2.bf16.msra.mxu0 0
    %1272 = vmatprep.subr.bf16.mxu0 0
    %1273 = vmatpush2.bf16.msra.mxu0 0
    %1274 = vmatprep.subr.bf16.mxu0 0
    %1275 = vmatpush2.bf16.msra.mxu0 0
    %1276 = vmatprep.subr.bf16.mxu0 0
    %1277 = vmatpush2.bf16.msra.mxu0 0
    %1278 = vmatprep.subr.bf16.mxu0 0
    %1279 = vmatpush2.bf16.msra.mxu0 0
    %1280 = vmatprep.subr.bf16.mxu0 0
    %1281 = vmatpush2.bf16.msra.mxu0 0
    %1282 = vmatprep.subr.bf16.mxu0 0
    %1283 = vmatpush2.bf16.msra.mxu0 0
    %1284 = vmatprep.subr.bf16.mxu0 0
    %1285 = vmatpush2.bf16.msra.mxu0 0
    %1286 = vmatprep.mubr.bf16.mxu0 0
    %1287 = vmatmul.mubr.bf16.gmra.mxu0 %v784
    %v1288 = vpop.f32.mrf.mxu0
    %v1289 = vadd.f32 %v862, %v1288
    %v1290 = vpop.f32.mrf.mxu0
    %v1291 = vadd.f32 %v866, %v1290
    %v1292 = vpop.f32.mrf.mxu0
    %v1293 = vadd.f32 %v862, %v1292
    %v1294 = vpop.f32.mrf.mxu0
    %v1295 = vadd.f32 %v866, %v1294
    %1296 = vdwg.mxu0
    %1297 = vmatprep.subr.bf16.mxu0 %v1144
    %1298 = vmatpush1.bf16.msra.mxu0 %v1143
    %1299 = vmatprep.subr.bf16.mxu0 %v1136
    %1300 = vmatpush1.bf16.msra.mxu0 %v1135
    %1301 = vmatprep.subr.bf16.mxu0 %v1128
    %1302 = vmatpush1.bf16.msra.mxu0 %v1127
    %1303 = vmatprep.subr.bf16.mxu0 %v1120
    %1304 = vmatpush1.bf16.msra.mxu0 %v1119
    %1305 = vmatprep.subr.bf16.mxu0 %v1112
    %1306 = vmatpush1.bf16.msra.mxu0 %v1111
    %1307 = vmatprep.subr.bf16.mxu0 %v1104
    %1308 = vmatpush1.bf16.msra.mxu0 %v1103
    %1309 = vmatprep.subr.bf16.mxu0 %v1096
    %1310 = vmatpush1.bf16.msra.mxu0 %v1095
    %1311 = vmatprep.subr.bf16.mxu0 %v1088
    %1312 = vmatpush1.bf16.msra.mxu0 %v1087
    %1313 = vmatprep.subr.bf16.mxu0 0
    %1314 = vmatpush2.bf16.msra.mxu0 0
    %1315 = vmatprep.subr.bf16.mxu0 0
    %1316 = vmatpush2.bf16.msra.mxu0 0
    %1317 = vmatprep.subr.bf16.mxu0 0
    %1318 = vmatpush2.bf16.msra.mxu0 0
    %1319 = vmatprep.subr.bf16.mxu0 0
    %1320 = vmatpush2.bf16.msra.mxu0 0
    %1321 = vmatprep.subr.bf16.mxu0 0
    %1322 = vmatpush2.bf16.msra.mxu0 0
    %1323 = vmatprep.subr.bf16.mxu0 0
    %1324 = vmatpush2.bf16.msra.mxu0 0
    %1325 = vmatprep.subr.bf16.mxu0 0
    %1326 = vmatpush2.bf16.msra.mxu0 0
    %1327 = vmatprep.subr.bf16.mxu0 0
    %1328 = vmatpush2.bf16.msra.mxu0 0
    %1329 = vmatprep.mubr.bf16.mxu0 0
    %1330 = vmatmul.mubr.bf16.gmra.mxu0 %v784
    %v1331 = vpop.f32.mrf.mxu0
    %v1332 = vadd.f32 %v870, %v1331
    %v1333 = vpop.f32.mrf.mxu0
    %v1334 = vadd.f32 %v874, %v1333
    %v1335 = vpop.f32.mrf.mxu0
    %v1336 = vadd.f32 %v870, %v1335
    %v1337 = vpop.f32.mrf.mxu0
    %v1338 = vadd.f32 %v874, %v1337
    %1339 = vdwg.mxu0
    %1340 = vmatprep.subr.bf16.mxu0 %v1146
    %1341 = vmatpush1.bf16.msra.mxu0 %v1145
    %1342 = vmatprep.subr.bf16.mxu0 %v1138
    %1343 = vmatpush1.bf16.msra.mxu0 %v1137
    %1344 = vmatprep.subr.bf16.mxu0 %v1130
    %1345 = vmatpush1.bf16.msra.mxu0 %v1129
    %1346 = vmatprep.subr.bf16.mxu0 %v1122
    %1347 = vmatpush1.bf16.msra.mxu0 %v1121
    %1348 = vmatprep.subr.bf16.mxu0 %v1114
    %1349 = vmatpush1.bf16.msra.mxu0 %v1113
    %1350 = vmatprep.subr.bf16.mxu0 %v1106
    %1351 = vmatpush1.bf16.msra.mxu0 %v1105
    %1352 = vmatprep.subr.bf16.mxu0 %v1098
    %1353 = vmatpush1.bf16.msra.mxu0 %v1097
    %1354 = vmatprep.subr.bf16.mxu0 %v1090
    %1355 = vmatpush1.bf16.msra.mxu0 %v1089
    %1356 = vmatprep.subr.bf16.mxu0 0
    %1357 = vmatpush2.bf16.msra.mxu0 0
    %1358 = vmatprep.subr.bf16.mxu0 0
    %1359 = vmatpush2.bf16.msra.mxu0 0
    %1360 = vmatprep.subr.bf16.mxu0 0
    %1361 = vmatpush2.bf16.msra.mxu0 0
    %1362 = vmatprep.subr.bf16.mxu0 0
    %1363 = vmatpush2.bf16.msra.mxu0 0
    %1364 = vmatprep.subr.bf16.mxu0 0
    %1365 = vmatpush2.bf16.msra.mxu0 0
    %1366 = vmatprep.subr.bf16.mxu0 0
    %1367 = vmatpush2.bf16.msra.mxu0 0
    %1368 = vmatprep.subr.bf16.mxu0 0
    %1369 = vmatpush2.bf16.msra.mxu0 0
    %1370 = vmatprep.subr.bf16.mxu0 0
    %1371 = vmatpush2.bf16.msra.mxu0 0
    %1372 = vmatprep.mubr.bf16.mxu0 0
    %1373 = vmatmul.mubr.bf16.gmra.mxu0 %v784
    %v1374 = vpop.f32.mrf.mxu0
    %v1375 = vadd.f32 %v878, %v1374
    %v1376 = vpop.f32.mrf.mxu0
    %v1377 = vadd.f32 %v882, %v1376
    %v1378 = vpop.f32.mrf.mxu0
    %v1379 = vadd.f32 %v878, %v1378
    %v1380 = vpop.f32.mrf.mxu0
    %v1381 = vadd.f32 %v882, %v1380
    %1382 = vdwg.mxu0
    %v1383 = vxor.u32 %v1246, 2147483648
    %v1384 = vxor.u32 %v1248, 2147483648
    %v1385 = vxor.u32 %v1289, 2147483648
    %v1386 = vxor.u32 %v1291, 2147483648
    %v1387 = vxor.u32 %v1332, 2147483648
    %v1388 = vxor.u32 %v1334, 2147483648
    %v1389 = vxor.u32 %v1375, 2147483648
    %v1390 = vxor.u32 %v1377, 2147483648
    %v1391 = vxor.u32 %v1250, 2147483648
    %v1392 = vxor.u32 %v1252, 2147483648
    %v1393 = vxor.u32 %v1293, 2147483648
    %v1394 = vxor.u32 %v1295, 2147483648
    %v1395 = vxor.u32 %v1336, 2147483648
    %v1396 = vxor.u32 %v1338, 2147483648
    %v1397 = vxor.u32 %v1379, 2147483648
    %v1398 = vxor.u32 %v1381, 2147483648
    %v1399 = vmul.f32 %v1383, 1.442695
    %v1400 = vpow.pop %v1399
    %v1401 = vmul.f32 %v1384, 1.442695
    %v1402 = vpow.pop %v1401
    %v1403 = vmul.f32 %v1385, 1.442695
    %v1404 = vpow.pop %v1403
    %v1405 = vmul.f32 %v1386, 1.442695
    %v1406 = vpow.pop %v1405
    %v1407 = vmul.f32 %v1387, 1.442695
    %v1408 = vpow.pop %v1407
    %v1409 = vmul.f32 %v1388, 1.442695
    %v1410 = vpow.pop %v1409
    %v1411 = vmul.f32 %v1389, 1.442695
    %v1412 = vpow.pop %v1411
    %v1413 = vmul.f32 %v1390, 1.442695
    %v1414 = vpow.pop %v1413
    %v1415 = vmul.f32 %v1391, 1.442695
    %v1416 = vpow.pop %v1415
    %v1417 = vmul.f32 %v1392, 1.442695
    %v1418 = vpow.pop %v1417
    %v1419 = vmul.f32 %v1393, 1.442695
    %v1420 = vpow.pop %v1419
    %v1421 = vmul.f32 %v1394, 1.442695
    %v1422 = vpow.pop %v1421
    %v1423 = vmul.f32 %v1395, 1.442695
    %v1424 = vpow.pop %v1423
    %v1425 = vmul.f32 %v1396, 1.442695
    %v1426 = vpow.pop %v1425
    %v1427 = vmul.f32 %v1397, 1.442695
    %v1428 = vpow.pop %v1427
    %v1429 = vmul.f32 %v1398, 1.442695
    %v1430 = vpow.pop %v1429
    %v1431 = vadd.f32 %v1400, 1.0
    %v1432 = vadd.f32 %v1402, 1.0
    %v1433 = vadd.f32 %v1404, 1.0
    %v1434 = vadd.f32 %v1406, 1.0
    %v1435 = vadd.f32 %v1408, 1.0
    %v1436 = vadd.f32 %v1410, 1.0
    %v1437 = vadd.f32 %v1412, 1.0
    %v1438 = vadd.f32 %v1414, 1.0
    %v1439 = vadd.f32 %v1416, 1.0
    %v1440 = vadd.f32 %v1418, 1.0
    %v1441 = vadd.f32 %v1420, 1.0
    %v1442 = vadd.f32 %v1422, 1.0
    %v1443 = vadd.f32 %v1424, 1.0
    %v1444 = vadd.f32 %v1426, 1.0
    %v1445 = vadd.f32 %v1428, 1.0
    %v1446 = vadd.f32 %v1430, 1.0
    %v1447 = vrcp.pop %v1431
    %v1448 = vmul.f32 1.0, %v1447
    %v1449 = vrcp.pop %v1432
    %v1450 = vmul.f32 1.0, %v1449
    %v1451 = vrcp.pop %v1433
    %v1452 = vmul.f32 1.0, %v1451
    %v1453 = vrcp.pop %v1434
    %v1454 = vmul.f32 1.0, %v1453
    %v1455 = vrcp.pop %v1435
    %v1456 = vmul.f32 1.0, %v1455
    %v1457 = vrcp.pop %v1436
    %v1458 = vmul.f32 1.0, %v1457
    %v1459 = vrcp.pop %v1437
    %v1460 = vmul.f32 1.0, %v1459
    %v1461 = vrcp.pop %v1438
    %v1462 = vmul.f32 1.0, %v1461
    %v1463 = vrcp.pop %v1439
    %v1464 = vmul.f32 1.0, %v1463
    %v1465 = vrcp.pop %v1440
    %v1466 = vmul.f32 1.0, %v1465
    %v1467 = vrcp.pop %v1441
    %v1468 = vmul.f32 1.0, %v1467
    %v1469 = vrcp.pop %v1442
    %v1470 = vmul.f32 1.0, %v1469
    %v1471 = vrcp.pop %v1443
    %v1472 = vmul.f32 1.0, %v1471
    %v1473 = vrcp.pop %v1444
    %v1474 = vmul.f32 1.0, %v1473
    %v1475 = vrcp.pop %v1445
    %v1476 = vmul.f32 1.0, %v1475
    %v1477 = vrcp.pop %v1446
    %v1478 = vmul.f32 1.0, %v1477
    %1479 = vst [vmem:[#allocation10] sm:$0xff] %v1448
    %1480 = vst [vmem:[#allocation10 + $0x8] sm:$0xff] %v1450
    %1481 = vst [vmem:[#allocation10 + $0x10] sm:$0xff] %v1452
    %1482 = vst [vmem:[#allocation10 + $0x18] sm:$0xff] %v1454
    %1483 = vst [vmem:[#allocation10 + $0x20] sm:$0xff] %v1456
    %1484 = vst [vmem:[#allocation10 + $0x28] sm:$0xff] %v1458
    %1485 = vst [vmem:[#allocation10 + $0x30] sm:$0xff] %v1460
    %1486 = vst [vmem:[#allocation10 + $0x38] sm:$0xff] %v1462
    %1487 = vst [vmem:[#allocation10 + $0x40] sm:$0xff] %v1464
    %1488 = vst [vmem:[#allocation10 + $0x48] sm:$0xff] %v1466
    %1489 = vst [vmem:[#allocation10 + $0x50] sm:$0xff] %v1468
    %1490 = vst [vmem:[#allocation10 + $0x58] sm:$0xff] %v1470
    %1491 = vst [vmem:[#allocation10 + $0x60] sm:$0xff] %v1472
    %1492 = vst [vmem:[#allocation10 + $0x68] sm:$0xff] %v1474
    %1493 = vst [vmem:[#allocation10 + $0x70] sm:$0xff] %v1476
    %1494 = vst [vmem:[#allocation10 + $0x78] sm:$0xff] %v1478
    // Predicated region
    $region38: #{tpu_custom_call.1} parent=1 // pred_check
      _
    $region39: #{tpu_custom_call.1} parent=1 // pred_check_branch
      %1496 = sbr.rel (0) target = $region41
    $region40: #{tpu_custom_call.1} parent=1 // pred_region
      %s1498 = ssub.s32 2048, 2048
      %1499 = vsyncadd [#allocation4], %s1498
      %s1500 = sshll.u32 [#allocation10], 4
      %s1501 = int_to_ptr.vmem [resolvable:$true] %s1500
      %1506 = dma.vmem_to_hbm [thread:$0]  %s1501, 2048, %s5, [#allocation4], 1024, 1024, 64
    $region41: #{tpu_custom_call.1} parent=1 // pred_fallthru
      _
    // Predicated region
    $region42: #{tpu_custom_call.1} parent=1 // pred_check
      _
    $region43: #{tpu_custom_call.1} parent=1 // pred_check_branch
      %1508 = sbr.rel (0) target = $region45
    $region44: #{tpu_custom_call.1} parent=1 // pred_region
      %1509 = dma.done [#allocation4], 2048
    $region45: #{tpu_custom_call.1} parent=1 // pred_fallthru
      _
    %1510 = vsyncpa [#allocation3], 1
    %1511 = vsyncpa [#allocation6], 1
    %1512 = vsyncpa [#allocation9], 1
    %1513 = vsyncpa [#allocation4], 1

// kernel: tpu_custom_call.1
$region0: #{tpu_custom_call.1}
  #allocation0 [shape = 'u32[]', space=smem, size = 0x4, offset = 0x4, fixed_abs, tag = 'smem constant byte address 0x4 - core index']
  #allocation1 [shape = 'u32[144,128]{1,0:T(1,128)}', space=vmem, size = 0x12000, scoped, tag = 'internal scratch']
  %s0 = inlined_call_operand.hbm [shape: f32[16,1024], index: 0, kind: input, shape index: {}]
  %s1 = inlined_call_operand.hbm [shape: bf16[1024,128], index: 1, kind: input, shape index: {}]
  %s2 = inlined_call_operand.vmem [shape: f32[1,128], index: 2, kind: input, shape index: {}]
  %s3 = inlined_call_operand.hbm [shape: bf16[128,1024], index: 3, kind: input, shape index: {}]
  %s4 = inlined_call_operand.hbm [shape: f32[1,1024], index: 4, kind: input, shape index: {}]
  %s5 = inlined_call_operand.hbm [shape: f32[16,1024], index: 5, kind: output, shape index: {}]
  %s6 = sld [smem:[#allocation0]]
  $region46: #{tpu_custom_call.1} parent=0
    _
  %s8 = ssub.s32 1, %s6
  %s9 = scalar_select 0, %s8, %s6
  $region1: #{tpu_custom_call.1} parent=0
    #allocation2 [shape = 'u8[65536]{0}', space=vmem, size = 0x10000, scoped, tag = 'input window, operand 0, single buffered']
    #allocation3 [shape = 's32[1]{0}', space=sflag, size = 0x4, scoped, tag = 'scoped memory for tpu_custom_call.1']
    #allocation4 [shape = 's32[1]{0}', space=sflag, size = 0x4, scoped, tag = 'scoped memory for tpu_custom_call.1']
    #allocation5 [shape = 'u8[262144]{0}', space=vmem, size = 0x40000, scoped, tag = 'input window, operand 1, single buffered']
    #allocation6 [shape = 's32[1]{0}', space=sflag, size = 0x4, scoped, tag = 'scoped memory for tpu_custom_call.1']
    #allocation7 [shape = 'u8[262144]{0}', space=vmem, size = 0x40000, scoped, tag = 'input window, operand 3, single buffered']
    #allocation8 [shape = 'u8[4096]{0}', space=vmem, size = 0x1000, scoped, tag = 'input window, operand 4, single buffered']
    #allocation9 [shape = 's32[1]{0}', space=sflag, size = 0x4, scoped, tag = 'scoped memory for tpu_custom_call.1']
    #allocation10 [shape = 'u8[65536]{0}', space=vmem, size = 0x10000, scoped, tag = 'output window, operand 0, single buffered']
    %10 = vsyncpa [#allocation3], 0
    %11 = vsyncpa [#allocation6], 0
    %12 = vsyncpa [#allocation9], 0
    %13 = vsyncpa [#allocation4], 0
    // Predicated region
    $region2: #{tpu_custom_call.1} parent=1 // pred_check
      _
    $region3: #{tpu_custom_call.1} parent=1 // pred_check_branch
      %15 = sbr.rel (0) target = $region5
    $region4: #{tpu_custom_call.1} parent=1 // pred_region
      %s17 = ssub.s32 2048, 2048
      %18 = vsyncadd [#allocation3], %s17
      %s19 = sshll.u32 [#allocation2], 4
      %s20 = int_to_ptr.vmem [resolvable:$true] %s19
      %25 = dma.hbm_to_vmem [thread:$0]  %s0, 2048, %s20, [#allocation3], 1024, 1024, 64
    $region5: #{tpu_custom_call.1} parent=1 // pred_fallthru
      _
    // Predicated region
    $region6: #{tpu_custom_call.1} parent=1 // pred_check
      _
    $region7: #{tpu_custom_call.1} parent=1 // pred_check_branch
      %27 = sbr.rel (0) target = $region9
    $region8: #{tpu_custom_call.1} parent=1 // pred_region
      %s29 = ssub.s32 8192, 8192
      %30 = vsyncadd [#allocation6], %s29
      %s31 = sshll.u32 [#allocation5], 4
      %s32 = int_to_ptr.vmem [resolvable:$true] %s31
      %37 = dma.hbm_to_vmem [thread:$0]  %s1, 8192, %s32, [#allocation6], 64, 64, 4
    $region9: #{tpu_custom_call.1} parent=1 // pred_fallthru
      _
    // Predicated region
    $region10: #{tpu_custom_call.1} parent=1 // pred_check
      _
    $region11: #{tpu_custom_call.1} parent=1 // pred_check_branch
      %39 = sbr.rel (0) target = $region13
    $region12: #{tpu_custom_call.1} parent=1 // pred_region
      _
    $region13: #{tpu_custom_call.1} parent=1 // pred_fallthru
      _
    // Predicated region
    $region14: #{tpu_custom_call.1} parent=1 // pred_check
      _
    $region15: #{tpu_custom_call.1} parent=1 // pred_check_branch
      %41 = sbr.rel (0) target = $region17
    $region16: #{tpu_custom_call.1} parent=1 // pred_region
      %s43 = ssub.s32 8192, 8192
      %44 = vsyncadd [#allocation6], %s43
      %s45 = sshll.u32 [#allocation7], 4
      %s46 = int_to_ptr.vmem [resolvable:$true] %s45
      %51 = dma.hbm_to_vmem [thread:$0]  %s3, 8192, %s46, [#allocation6], 512, 512, 32
    $region17: #{tpu_custom_call.1} parent=1 // pred_fallthru
      _
    // Predicated region
    $region18: #{tpu_custom_call.1} parent=1 // pred_check
      _
    $region19: #{tpu_custom_call.1} parent=1 // pred_check_branch
      %53 = sbr.rel (0) target = $region21
    $region20: #{tpu_custom_call.1} parent=1 // pred_region
      %s55 = ssub.s32 128, 128
      %56 = vsyncadd [#allocation9], %s55
      %s58 = sshll.u32 [#allocation8], 4
      %s59 = int_to_ptr.vmem [resolvable:$true] %s58
      %61 = dma.hbm_to_vmem [thread:$0]  %s4, 128, %s59, [#allocation9]
    $region21: #{tpu_custom_call.1} parent=1 // pred_fallthru
      _
    // Predicated region
    $region22: #{tpu_custom_call.1} parent=1 // pred_check
      _
    $region23: #{tpu_custom_call.1} parent=1 // pred_check_branch
      %63 = sbr.rel (0) target = $region25
    $region24: #{tpu_custom_call.1} parent=1 // pred_region
      %64 = dma.done [#allocation3], 2048
    $region25: #{tpu_custom_call.1} parent=1 // pred_fallthru
      _
    // Predicated region
    $region26: #{tpu_custom_call.1} parent=1 // pred_check
      _
    $region27: #{tpu_custom_call.1} parent=1 // pred_check_branch
      %66 = sbr.rel (0) target = $region29
    $region28: #{tpu_custom_call.1} parent=1 // pred_region
      %67 = dma.done [#allocation6], 8192
    $region29: #{tpu_custom_call.1} parent=1 // pred_fallthru
      _
    // Predicated region
    $region30: #{tpu_custom_call.1} parent=1 // pred_check
      _
    $region31: #{tpu_custom_call.1} parent=1 // pred_check_branch
      %69 = sbr.rel (0) target = $region33
    $region32: #{tpu_custom_call.1} parent=1 // pred_region
      %70 = dma.done [#allocation6], 8192
    $region33: #{tpu_custom_call.1} parent=1 // pred_fallthru
      _
    // Predicated region
    $region34: #{tpu_custom_call.1} parent=1 // pred_check
      _
    $region35: #{tpu_custom_call.1} parent=1 // pred_check_branch
      %72 = sbr.rel (0) target = $region37
    $region36: #{tpu_custom_call.1} parent=1 // pred_region
      %73 = dma.done [#allocation9], 128
    $region37: #{tpu_custom_call.1} parent=1 // pred_fallthru
      _
    %v75 = vld [vmem:[#allocation2] sm:$0xff]
    %v76 = vld [vmem:[#allocation2 + $0x8] sm:$0xff]
    %v77 = vld [vmem:[#allocation2 + $0x10] sm:$0xff]
    %v78 = vld [vmem:[#allocation2 + $0x18] sm:$0xff]
    %v79 = vld [vmem:[#allocation2 + $0x20] sm:$0xff]
    %v80 = vld [vmem:[#allocation2 + $0x28] sm:$0xff]
    %v81 = vld [vmem:[#allocation2 + $0x30] sm:$0xff]
    %v82 = vld [vmem:[#allocation2 + $0x38] sm:$0xff]
    %v83 = vld [vmem:[#allocation2 + $0x40] sm:$0xff]
    %v84 = vld [vmem:[#allocation2 + $0x48] sm:$0xff]
    %v85 = vld [vmem:[#allocation2 + $0x50] sm:$0xff]
    %v86 = vld [vmem:[#allocation2 + $0x58] sm:$0xff]
    %v87 = vld [vmem:[#allocation2 + $0x60] sm:$0xff]
    %v88 = vld [vmem:[#allocation2 + $0x68] sm:$0xff]
    %v89 = vld [vmem:[#allocation2 + $0x70] sm:$0xff]
    %v90 = vld [vmem:[#allocation2 + $0x78] sm:$0xff]
    %v91 = vpack.c.bf16 %v83, %v75
    %v92 = vpack.c.bf16 %v84, %v76
    %v93 = vpack.c.bf16 %v85, %v77
    %v94 = vpack.c.bf16 %v86, %v78
    %v95 = vpack.c.bf16 %v87, %v79
    %v96 = vpack.c.bf16 %v88, %v80
    %v97 = vpack.c.bf16 %v89, %v81
    %v98 = vpack.c.bf16 %v90, %v82
    %v99 = vld [vmem:[#allocation5] sm:$0xf]
    %v100 = vld [vmem:[#allocation5 + $0x4] sm:$0xf]
    %v101 = vld [vmem:[#allocation5 + $0x8] sm:$0xf]
    %v102 = vld [vmem:[#allocation5 + $0xc] sm:$0xf]
    %v103 = vld [vmem:[#allocation5 + $0x10] sm:$0xf]
    %v104 = vld [vmem:[#allocation5 + $0x14] sm:$0xf]
    %v105 = vld [vmem:[#allocation5 + $0x18] sm:$0xf]
    %v106 = vld [vmem:[#allocation5 + $0x1c] sm:$0xf]
    %v107 = vld [vmem:[#allocation5 + $0x20] sm:$0xf]
    %v108 = vld [vmem:[#allocation5 + $0x24] sm:$0xf]
    %v109 = vld [vmem:[#allocation5 + $0x28] sm:$0xf]
    %v110 = vld [vmem:[#allocation5 + $0x2c] sm:$0xf]
    %v111 = vld [vmem:[#allocation5 + $0x30] sm:$0xf]
    %v112 = vld [vmem:[#allocation5 + $0x34] sm:$0xf]
    %v113 = vld [vmem:[#allocation5 + $0x38] sm:$0xf]
    %v114 = vld [vmem:[#allocation5 + $0x3c] sm:$0xf]
    %v115 = vld [vmem:[#allocation5 + $0x40] sm:$0xf]
    %v116 = vld [vmem:[#allocation5 + $0x44] sm:$0xf]
    %v117 = vld [vmem:[#allocation5 + $0x48] sm:$0xf]
    %v118 = vld [vmem:[#allocation5 + $0x4c] sm:$0xf]
    %v119 = vld [vmem:[#allocation5 + $0x50] sm:$0xf]
    %v120 = vld [vmem:[#allocation5 + $0x54] sm:$0xf]
    %v121 = vld [vmem:[#allocation5 + $0x58] sm:$0xf]
    %v122 = vld [vmem:[#allocation5 + $0x5c] sm:$0xf]
    %v123 = vld [vmem:[#allocation5 + $0x60] sm:$0xf]
    %v124 = vld [vmem:[#allocation5 + $0x64] sm:$0xf]
    %v125 = vld [vmem:[#allocation5 + $0x68] sm:$0xf]
    %v126 = vld [vmem:[#allocation5 + $0x6c] sm:$0xf]
    %v127 = vld [vmem:[#allocation5 + $0x70] sm:$0xf]
    %v128 = vld [vmem:[#allocation5 + $0x74] sm:$0xf]
    %v129 = vld [vmem:[#allocation5 + $0x78] sm:$0xf]
    %v130 = vld [vmem:[#allocation5 + $0x7c] sm:$0xf]
    %v131 = vld [vmem:[#allocation5 + $0x80] sm:$0xf]
    %v132 = vld [vmem:[#allocation5 + $0x84] sm:$0xf]
    %v133 = vld [vmem:[#allocation5 + $0x88] sm:$0xf]
    %v134 = vld [vmem:[#allocation5 + $0x8c] sm:$0xf]
    %v135 = vld [vmem:[#allocation5 + $0x90] sm:$0xf]
    %v136 = vld [vmem:[#allocation5 + $0x94] sm:$0xf]
    %v137 = vld [vmem:[#allocation5 + $0x98] sm:$0xf]
    %v138 = vld [vmem:[#allocation5 + $0x9c] sm:$0xf]
    %v139 = vld [vmem:[#allocation5 + $0xa0] sm:$0xf]
    %v140 = vld [vmem:[#allocation5 + $0xa4] sm:$0xf]
    %v141 = vld [vmem:[#allocation5 + $0xa8] sm:$0xf]
    %v142 = vld [vmem:[#allocation5 + $0xac] sm:$0xf]
    %v143 = vld [vmem:[#allocation5 + $0xb0] sm:$0xf]
    %v144 = vld [vmem:[#allocation5 + $0xb4] sm:$0xf]
    %v145 = vld [vmem:[#allocation5 + $0xb8] sm:$0xf]
    %v146 = vld [vmem:[#allocation5 + $0xbc] sm:$0xf]
    %v147 = vld [vmem:[#allocation5 + $0xc0] sm:$0xf]
    %v148 = vld [vmem:[#allocation5 + $0xc4] sm:$0xf]
    %v149 = vld [vmem:[#allocation5 + $0xc8] sm:$0xf]
    %v150 = vld [vmem:[#allocation5 + $0xcc] sm:$0xf]
    %v151 = vld [vmem:[#allocation5 + $0xd0] sm:$0xf]
    %v152 = vld [vmem:[#allocation5 + $0xd4] sm:$0xf]
    %v153 = vld [vmem:[#allocation5 + $0xd8] sm:$0xf]
    %v154 = vld [vmem:[#allocation5 + $0xdc] sm:$0xf]
    %v155 = vld [vmem:[#allocation5 + $0xe0] sm:$0xf]
    %v156 = vld [vmem:[#allocation5 + $0xe4] sm:$0xf]
    %v157 = vld [vmem:[#allocation5 + $0xe8] sm:$0xf]
    %v158 = vld [vmem:[#allocation5 + $0xec] sm:$0xf]
    %v159 = vld [vmem:[#allocation5 + $0xf0] sm:$0xf]
    %v160 = vld [vmem:[#allocation5 + $0xf4] sm:$0xf]
    %v161 = vld [vmem:[#allocation5 + $0xf8] sm:$0xf]
    %v162 = vld [vmem:[#allocation5 + $0xfc] sm:$0xf]
    %v163 = vld [vmem:[#allocation5 + $0x100] sm:$0xf]
    %v164 = vld [vmem:[#allocation5 + $0x104] sm:$0xf]
    %v165 = vld [vmem:[#allocation5 + $0x108] sm:$0xf]
    %v166 = vld [vmem:[#allocation5 + $0x10c] sm:$0xf]
    %v167 = vld [vmem:[#allocation5 + $0x110] sm:$0xf]
    %v168 = vld [vmem:[#allocation5 + $0x114] sm:$0xf]
    %v169 = vld [vmem:[#allocation5 + $0x118] sm:$0xf]
    %v170 = vld [vmem:[#allocation5 + $0x11c] sm:$0xf]
    %v171 = vld [vmem:[#allocation5 + $0x120] sm:$0xf]
    %v172 = vld [vmem:[#allocation5 + $0x124] sm:$0xf]
    %v173 = vld [vmem:[#allocation5 + $0x128] sm:$0xf]
    %v174 = vld [vmem:[#allocation5 + $0x12c] sm:$0xf]
    %v175 = vld [vmem:[#allocation5 + $0x130] sm:$0xf]
    %v176 = vld [vmem:[#allocation5 + $0x134] sm:$0xf]
    %v177 = vld [vmem:[#allocation5 + $0x138] sm:$0xf]
    %v178 = vld [vmem:[#allocation5 + $0x13c] sm:$0xf]
    %v179 = vld [vmem:[#allocation5 + $0x140] sm:$0xf]
    %v180 = vld [vmem:[#allocation5 + $0x144] sm:$0xf]
    %v181 = vld [vmem:[#allocation5 + $0x148] sm:$0xf]
    %v182 = vld [vmem:[#allocation5 + $0x14c] sm:$0xf]
    %v183 = vld [vmem:[#allocation5 + $0x150] sm:$0xf]
    %v184 = vld [vmem:[#allocation5 + $0x154] sm:$0xf]
    %v185 = vld [vmem:[#allocation5 + $0x158] sm:$0xf]
    %v186 = vld [vmem:[#allocation5 + $0x15c] sm:$0xf]
    %v187 = vld [vmem:[#allocation5 + $0x160] sm:$0xf]
    %v188 = vld [vmem:[#allocation5 + $0x164] sm:$0xf]
    %v189 = vld [vmem:[#allocation5 + $0x168] sm:$0xf]
    %v190 = vld [vmem:[#allocation5 + $0x16c] sm:$0xf]
    %v191 = vld [vmem:[#allocation5 + $0x170] sm:$0xf]
    %v192 = vld [vmem:[#allocation5 + $0x174] sm:$0xf]
    %v193 = vld [vmem:[#allocation5 + $0x178] sm:$0xf]
    %v194 = vld [vmem:[#allocation5 + $0x17c] sm:$0xf]
    %v195 = vld [vmem:[#allocation5 + $0x180] sm:$0xf]
    %v196 = vld [vmem:[#allocation5 + $0x184] sm:$0xf]
    %v197 = vld [vmem:[#allocation5 + $0x188] sm:$0xf]
    %v198 = vld [vmem:[#allocation5 + $0x18c] sm:$0xf]
    %v199 = vld [vmem:[#allocation5 + $0x190] sm:$0xf]
    %v200 = vld [vmem:[#allocation5 + $0x194] sm:$0xf]
    %v201 = vld [vmem:[#allocation5 + $0x198] sm:$0xf]
    %v202 = vld [vmem:[#allocation5 + $0x19c] sm:$0xf]
    %v203 = vld [vmem:[#allocation5 + $0x1a0] sm:$0xf]
    %v204 = vld [vmem:[#allocation5 + $0x1a4] sm:$0xf]
    %v205 = vld [vmem:[#allocation5 + $0x1a8] sm:$0xf]
    %v206 = vld [vmem:[#allocation5 + $0x1ac] sm:$0xf]
    %v207 = vld [vmem:[#allocation5 + $0x1b0] sm:$0xf]
    %v208 = vld [vmem:[#allocation5 + $0x1b4] sm:$0xf]
    %v209 = vld [vmem:[#allocation5 + $0x1b8] sm:$0xf]
    %v210 = vld [vmem:[#allocation5 + $0x1bc] sm:$0xf]
    %v211 = vld [vmem:[#allocation5 + $0x1c0] sm:$0xf]
    %v212 = vld [vmem:[#allocation5 + $0x1c4] sm:$0xf]
    %v213 = vld [vmem:[#allocation5 + $0x1c8] sm:$0xf]
    %v214 = vld [vmem:[#allocation5 + $0x1cc] sm:$0xf]
    %v215 = vld [vmem:[#allocation5 + $0x1d0] sm:$0xf]
    %v216 = vld [vmem:[#allocation5 + $0x1d4] sm:$0xf]
    %v217 = vld [vmem:[#allocation5 + $0x1d8] sm:$0xf]
    %v218 = vld [vmem:[#allocation5 + $0x1dc] sm:$0xf]
    %v219 = vld [vmem:[#allocation5 + $0x1e0] sm:$0xf]
    %v220 = vld [vmem:[#allocation5 + $0x1e4] sm:$0xf]
    %v221 = vld [vmem:[#allocation5 + $0x1e8] sm:$0xf]
    %v222 = vld [vmem:[#allocation5 + $0x1ec] sm:$0xf]
    %v223 = vld [vmem:[#allocation5 + $0x1f0] sm:$0xf]
    %v224 = vld [vmem:[#allocation5 + $0x1f4] sm:$0xf]
    %v225 = vld [vmem:[#allocation5 + $0x1f8] sm:$0xf]
    %v226 = vld [vmem:[#allocation5 + $0x1fc] sm:$0xf]
    %v227 = vld [vmem:[%s2] sm:$0x1]
    %v229 = vlaneseq
    %v230 = vshrl.u32 %v229, 7
    %v231 = vsub.s32 0, %v230
    %v232 = vrot.slane %v227, %v231
    %v362 = vunpack.c.l.b16 %v99
    %v363 = vunpack.c.l.b16 %v100
    %v364 = vunpack.c.l.b16 %v101
    %v365 = vunpack.c.l.b16 %v102
    %v366 = vunpack.c.l.b16 %v103
    %v367 = vunpack.c.l.b16 %v104
    %v368 = vunpack.c.l.b16 %v105
    %v369 = vunpack.c.l.b16 %v106
    %v370 = vunpack.c.l.b16 %v107
    %v371 = vunpack.c.l.b16 %v108
    %v372 = vunpack.c.l.b16 %v109
    %v373 = vunpack.c.l.b16 %v110
    %v374 = vunpack.c.l.b16 %v111
    %v375 = vunpack.c.l.b16 %v112
    %v376 = vunpack.c.l.b16 %v113
    %v377 = vunpack.c.l.b16 %v114
    %v378 = vunpack.c.l.b16 %v115
    %v379 = vunpack.c.l.b16 %v116
    %v380 = vunpack.c.l.b16 %v117
    %v381 = vunpack.c.l.b16 %v118
    %v382 = vunpack.c.l.b16 %v119
    %v383 = vunpack.c.l.b16 %v120
    %v384 = vunpack.c.l.b16 %v121
    %v385 = vunpack.c.l.b16 %v122
    %v386 = vunpack.c.l.b16 %v123
    %v387 = vunpack.c.l.b16 %v124
    %v388 = vunpack.c.l.b16 %v125
    %v389 = vunpack.c.l.b16 %v126
    %v390 = vunpack.c.l.b16 %v127
    %v391 = vunpack.c.l.b16 %v128
    %v392 = vunpack.c.l.b16 %v129
    %v393 = vunpack.c.l.b16 %v130
    %v394 = vunpack.c.l.b16 %v131
    %v395 = vunpack.c.l.b16 %v132
    %v396 = vunpack.c.l.b16 %v133
    %v397 = vunpack.c.l.b16 %v134
    %v398 = vunpack.c.l.b16 %v135
    %v399 = vunpack.c.l.b16 %v136
    %v400 = vunpack.c.l.b16 %v137
    %v401 = vunpack.c.l.b16 %v138
    %v402 = vunpack.c.l.b16 %v139
    %v403 = vunpack.c.l.b16 %v140
    %v404 = vunpack.c.l.b16 %v141
    %v405 = vunpack.c.l.b16 %v142
    %v406 = vunpack.c.l.b16 %v143
    %v407 = vunpack.c.l.b16 %v144
    %v408 = vunpack.c.l.b16 %v145
    %v409 = vunpack.c.l.b16 %v146
    %v410 = vunpack.c.l.b16 %v147
    %v411 = vunpack.c.l.b16 %v148
    %v412 = vunpack.c.l.b16 %v149
    %v413 = vunpack.c.l.b16 %v150
    %v414 = vunpack.c.l.b16 %v151
    %v415 = vunpack.c.l.b16 %v152
    %v416 = vunpack.c.l.b16 %v153
    %v417 = vunpack.c.l.b16 %v154
    %v418 = vunpack.c.l.b16 %v155
    %v419 = vunpack.c.l.b16 %v156
    %v420 = vunpack.c.l.b16 %v157
    %v421 = vunpack.c.l.b16 %v158
    %v422 = vunpack.c.l.b16 %v159
    %v423 = vunpack.c.l.b16 %v160
    %v424 = vunpack.c.l.b16 %v161
    %v425 = vunpack.c.l.b16 %v162
    %v426 = vunpack.c.l.b16 %v163
    %v427 = vunpack.c.l.b16 %v164
    %v428 = vunpack.c.l.b16 %v165
    %v429 = vunpack.c.l.b16 %v166
    %v430 = vunpack.c.l.b16 %v167
    %v431 = vunpack.c.l.b16 %v168
    %v432 = vunpack.c.l.b16 %v169
    %v433 = vunpack.c.l.b16 %v170
    %v434 = vunpack.c.l.b16 %v171
    %v435 = vunpack.c.l.b16 %v172
    %v436 = vunpack.c.l.b16 %v173
    %v437 = vunpack.c.l.b16 %v174
    %v438 = vunpack.c.l.b16 %v175
    %v439 = vunpack.c.l.b16 %v176
    %v440 = vunpack.c.l.b16 %v177
    %v441 = vunpack.c.l.b16 %v178
    %v442 = vunpack.c.l.b16 %v179
    %v443 = vunpack.c.l.b16 %v180
    %v444 = vunpack.c.l.b16 %v181
    %v445 = vunpack.c.l.b16 %v182
    %v446 = vunpack.c.l.b16 %v183
    %v447 = vunpack.c.l.b16 %v184
    %v448 = vunpack.c.l.b16 %v185
    %v449 = vunpack.c.l.b16 %v186
    %v450 = vunpack.c.l.b16 %v187
    %v451 = vunpack.c.l.b16 %v188
    %v452 = vunpack.c.l.b16 %v189
    %v453 = vunpack.c.l.b16 %v190
    %v454 = vunpack.c.l.b16 %v191
    %v455 = vunpack.c.l.b16 %v192
    %v456 = vunpack.c.l.b16 %v193
    %v457 = vunpack.c.l.b16 %v194
    %v458 = vunpack.c.l.b16 %v195
    %v459 = vunpack.c.l.b16 %v196
    %v460 = vunpack.c.l.b16 %v197
    %v461 = vunpack.c.l.b16 %v198
    %v462 = vunpack.c.l.b16 %v199
    %v463 = vunpack.c.l.b16 %v200
    %v464 = vunpack.c.l.b16 %v201
    %v465 = vunpack.c.l.b16 %v202
    %v466 = vunpack.c.l.b16 %v203
    %v467 = vunpack.c.l.b16 %v204
    %v468 = vunpack.c.l.b16 %v205
    %v469 = vunpack.c.l.b16 %v206
    %v470 = vunpack.c.l.b16 %v207
    %v471 = vunpack.c.l.b16 %v208
    %v472 = vunpack.c.l.b16 %v209
    %v473 = vunpack.c.l.b16 %v210
    %v474 = vunpack.c.l.b16 %v211
    %v475 = vunpack.c.l.b16 %v212
    %v476 = vunpack.c.l.b16 %v213
    %v477 = vunpack.c.l.b16 %v214
    %v478 = vunpack.c.l.b16 %v215
    %v479 = vunpack.c.l.b16 %v216
    %v480 = vunpack.c.l.b16 %v217
    %v481 = vunpack.c.l.b16 %v218
    %v482 = vunpack.c.l.b16 %v219
    %v483 = vunpack.c.l.b16 %v220
    %v484 = vunpack.c.l.b16 %v221
    %v485 = vunpack.c.l.b16 %v222
    %v486 = vunpack.c.l.b16 %v223
    %v487 = vunpack.c.l.b16 %v224
    %v488 = vunpack.c.l.b16 %v225
    %v489 = vunpack.c.l.b16 %v226
    %v490 = vpack.c.b16 %v363, %v362
    %v491 = vpack.c.b16 %v365, %v364
    %v492 = vpack.c.b16 %v367, %v366
    %v493 = vpack.c.b16 %v369, %v368
    %v494 = vpack.c.b16 %v371, %v370
    %v495 = vpack.c.b16 %v373, %v372
    %v496 = vpack.c.b16 %v375, %v374
    %v497 = vpack.c.b16 %v377, %v376
    %v498 = vpack.c.b16 %v379, %v378
    %v499 = vpack.c.b16 %v381, %v380
    %v500 = vpack.c.b16 %v383, %v382
    %v501 = vpack.c.b16 %v385, %v384
    %v502 = vpack.c.b16 %v387, %v386
    %v503 = vpack.c.b16 %v389, %v388
    %v504 = vpack.c.b16 %v391, %v390
    %v505 = vpack.c.b16 %v393, %v392
    %v506 = vpack.c.b16 %v395, %v394
    %v507 = vpack.c.b16 %v397, %v396
    %v508 = vpack.c.b16 %v399, %v398
    %v509 = vpack.c.b16 %v401, %v400
    %v510 = vpack.c.b16 %v403, %v402
    %v511 = vpack.c.b16 %v405, %v404
    %v512 = vpack.c.b16 %v407, %v406
    %v513 = vpack.c.b16 %v409, %v408
    %v514 = vpack.c.b16 %v411, %v410
    %v515 = vpack.c.b16 %v413, %v412
    %v516 = vpack.c.b16 %v415, %v414
    %v517 = vpack.c.b16 %v417, %v416
    %v518 = vpack.c.b16 %v419, %v418
    %v519 = vpack.c.b16 %v421, %v420
    %v520 = vpack.c.b16 %v423, %v422
    %v521 = vpack.c.b16 %v425, %v424
    %v522 = vpack.c.b16 %v427, %v426
    %v523 = vpack.c.b16 %v429, %v428
    %v524 = vpack.c.b16 %v431, %v430
    %v525 = vpack.c.b16 %v433, %v432
    %v526 = vpack.c.b16 %v435, %v434
    %v527 = vpack.c.b16 %v437, %v436
    %v528 = vpack.c.b16 %v439, %v438
    %v529 = vpack.c.b16 %v441, %v440
    %v530 = vpack.c.b16 %v443, %v442
    %v531 = vpack.c.b16 %v445, %v444
    %v532 = vpack.c.b16 %v447, %v446
    %v533 = vpack.c.b16 %v449, %v448
    %v534 = vpack.c.b16 %v451, %v450
    %v535 = vpack.c.b16 %v453, %v452
    %v536 = vpack.c.b16 %v455, %v454
    %v537 = vpack.c.b16 %v457, %v456
    %v538 = vpack.c.b16 %v459, %v458
    %v539 = vpack.c.b16 %v461, %v460
    %v540 = vpack.c.b16 %v463, %v462
    %v541 = vpack.c.b16 %v465, %v464
    %v542 = vpack.c.b16 %v467, %v466
    %v543 = vpack.c.b16 %v469, %v468
    %v544 = vpack.c.b16 %v471, %v470
    %v545 = vpack.c.b16 %v473, %v472
    %v546 = vpack.c.b16 %v475, %v474
    %v547 = vpack.c.b16 %v477, %v476
    %v548 = vpack.c.b16 %v479, %v478
    %v549 = vpack.c.b16 %v481, %v480
    %v550 = vpack.c.b16 %v483, %v482
    %v551 = vpack.c.b16 %v485, %v484
    %v552 = vpack.c.b16 %v487, %v486
    %v553 = vpack.c.b16 %v489, %v488
    %618 = vmatprep.subr.bf16.mxu0 0
    %619 = vmatpush1.bf16.msra.mxu0 %v497
    %620 = vmatprep.subr.bf16.mxu0 0
    %621 = vmatpush1.bf16.msra.mxu0 %v496
    %622 = vmatprep.subr.bf16.mxu0 0
    %623 = vmatpush1.bf16.msra.mxu0 %v495
    %624 = vmatprep.subr.bf16.mxu0 0
    %625 = vmatpush1.bf16.msra.mxu0 %v494
    %626 = vmatprep.subr.bf16.mxu0 0
    %627 = vmatpush1.bf16.msra.mxu0 %v493
    %628 = vmatprep.subr.bf16.mxu0 0
    %629 = vmatpush1.bf16.msra.mxu0 %v492
    %630 = vmatprep.subr.bf16.mxu0 0
    %631 = vmatpush1.bf16.msra.mxu0 %v491
    %632 = vmatprep.subr.bf16.mxu0 0
    %633 = vmatpush1.bf16.msra.mxu0 %v490
    %634 = vmatprep.subr.bf16.mxu0 0
    %635 = vmatpush2.bf16.msra.mxu0 %v505
    %636 = vmatprep.subr.bf16.mxu0 0
    %637 = vmatpush2.bf16.msra.mxu0 %v504
    %638 = vmatprep.subr.bf16.mxu0 0
    %639 = vmatpush2.bf16.msra.mxu0 %v503
    %640 = vmatprep.subr.bf16.mxu0 0
    %641 = vmatpush2.bf16.msra.mxu0 %v502
    %642 = vmatprep.subr.bf16.mxu0 0
    %643 = vmatpush2.bf16.msra.mxu0 %v501
    %644 = vmatprep.subr.bf16.mxu0 0
    %645 = vmatpush2.bf16.msra.mxu0 %v500
    %646 = vmatprep.subr.bf16.mxu0 0
    %647 = vmatpush2.bf16.msra.mxu0 %v499
    %648 = vmatprep.subr.bf16.mxu0 0
    %649 = vmatpush2.bf16.msra.mxu0 %v498
    %650 = vmatprep.mubr.bf16.mxu0 %v92
    %651 = vmatmul.mubr.bf16.gmra.mxu0 %v91
    %v652 = vpop.f32.mrf.mxu0
    %v653 = vadd.f32 %v232, %v652
    %v654 = vpop.f32.mrf.mxu0
    %v655 = vpop.f32.mrf.mxu0
    %v656 = vadd.f32 %v232, %v655
    %v657 = vpop.f32.mrf.mxu0
    %658 = vdwg.mxu0
    %659 = vmatprep.subr.bf16.mxu0 0
    %660 = vmatpush1.bf16.msra.mxu0 %v513
    %661 = vmatprep.subr.bf16.mxu0 0
    %662 = vmatpush1.bf16.msra.mxu0 %v512
    %663 = vmatprep.subr.bf16.mxu0 0
    %664 = vmatpush1.bf16.msra.mxu0 %v511
    %665 = vmatprep.subr.bf16.mxu0 0
    %666 = vmatpush1.bf16.msra.mxu0 %v510
    %667 = vmatprep.subr.bf16.mxu0 0
    %668 = vmatpush1.bf16.msra.mxu0 %v509
    %669 = vmatprep.subr.bf16.mxu0 0
    %670 = vmatpush1.bf16.msra.mxu0 %v508
    %671 = vmatprep.subr.bf16.mxu0 0
    %672 = vmatpush1.bf16.msra.mxu0 %v507
    %673 = vmatprep.subr.bf16.mxu0 0
    %674 = vmatpush1.bf16.msra.mxu0 %v506
    %675 = vmatprep.subr.bf16.mxu0 0
    %676 = vmatpush2.bf16.msra.mxu0 %v521
    %677 = vmatprep.subr.bf16.mxu0 0
    %678 = vmatpush2.bf16.msra.mxu0 %v520
    %679 = vmatprep.subr.bf16.mxu0 0
    %680 = vmatpush2.bf16.msra.mxu0 %v519
    %681 = vmatprep.subr.bf16.mxu0 0
    %682 = vmatpush2.bf16.msra.mxu0 %v518
    %683 = vmatprep.subr.bf16.mxu0 0
    %684 = vmatpush2.bf16.msra.mxu0 %v517
    %685 = vmatprep.subr.bf16.mxu0 0
    %686 = vmatpush2.bf16.msra.mxu0 %v516
    %687 = vmatprep.subr.bf16.mxu0 0
    %688 = vmatpush2.bf16.msra.mxu0 %v515
    %689 = vmatprep.subr.bf16.mxu0 0
    %690 = vmatpush2.bf16.msra.mxu0 %v514
    %691 = vmatprep.mubr.bf16.mxu0 %v94
    %692 = vmatmul.mubr.bf16.gmra.mxu0 %v93
    %v693 = vpop.f32.mrf.mxu0
    %v694 = vadd.f32 %v653, %v693
    %v695 = vpop.f32.mrf.mxu0
    %v696 = vpop.f32.mrf.mxu0
    %v697 = vadd.f32 %v656, %v696
    %v698 = vpop.f32.mrf.mxu0
    %699 = vdwg.mxu0
    %700 = vmatprep.subr.bf16.mxu0 0
    %701 = vmatpush1.bf16.msra.mxu0 %v529
    %702 = vmatprep.subr.bf16.mxu0 0
    %703 = vmatpush1.bf16.msra.mxu0 %v528
    %704 = vmatprep.subr.bf16.mxu0 0
    %705 = vmatpush1.bf16.msra.mxu0 %v527
    %706 = vmatprep.subr.bf16.mxu0 0
    %707 = vmatpush1.bf16.msra.mxu0 %v526
    %708 = vmatprep.subr.bf16.mxu0 0
    %709 = vmatpush1.bf16.msra.mxu0 %v525
    %710 = vmatprep.subr.bf16.mxu0 0
    %711 = vmatpush1.bf16.msra.mxu0 %v524
    %712 = vmatprep.subr.bf16.mxu0 0
    %713 = vmatpush1.bf16.msra.mxu0 %v523
    %714 = vmatprep.subr.bf16.mxu0 0
    %715 = vmatpush1.bf16.msra.mxu0 %v522
    %716 = vmatprep.subr.bf16.mxu0 0
    %717 = vmatpush2.bf16.msra.mxu0 %v537
    %718 = vmatprep.subr.bf16.mxu0 0
    %719 = vmatpush2.bf16.msra.mxu0 %v536
    %720 = vmatprep.subr.bf16.mxu0 0
    %721 = vmatpush2.bf16.msra.mxu0 %v535
    %722 = vmatprep.subr.bf16.mxu0 0
    %723 = vmatpush2.bf16.msra.mxu0 %v534
    %724 = vmatprep.subr.bf16.mxu0 0
    %725 = vmatpush2.bf16.msra.mxu0 %v533
    %726 = vmatprep.subr.bf16.mxu0 0
    %727 = vmatpush2.bf16.msra.mxu0 %v532
    %728 = vmatprep.subr.bf16.mxu0 0
    %729 = vmatpush2.bf16.msra.mxu0 %v531
    %730 = vmatprep.subr.bf16.mxu0 0
    %731 = vmatpush2.bf16.msra.mxu0 %v530
    %732 = vmatprep.mubr.bf16.mxu0 %v96
    %733 = vmatmul.mubr.bf16.gmra.mxu0 %v95
    %v734 = vpop.f32.mrf.mxu0
    %v735 = vadd.f32 %v694, %v734
    %v736 = vpop.f32.mrf.mxu0
    %v737 = vpop.f32.mrf.mxu0
    %v738 = vadd.f32 %v697, %v737
    %v739 = vpop.f32.mrf.mxu0
    %740 = vdwg.mxu0
    %741 = vmatprep.subr.bf16.mxu0 0
    %742 = vmatpush1.bf16.msra.mxu0 %v545
    %743 = vmatprep.subr.bf16.mxu0 0
    %744 = vmatpush1.bf16.msra.mxu0 %v544
    %745 = vmatprep.subr.bf16.mxu0 0
    %746 = vmatpush1.bf16.msra.mxu0 %v543
    %747 = vmatprep.subr.bf16.mxu0 0
    %748 = vmatpush1.bf16.msra.mxu0 %v542
    %749 = vmatprep.subr.bf16.mxu0 0
    %750 = vmatpush1.bf16.msra.mxu0 %v541
    %751 = vmatprep.subr.bf16.mxu0 0
    %752 = vmatpush1.bf16.msra.mxu0 %v540
    %753 = vmatprep.subr.bf16.mxu0 0
    %754 = vmatpush1.bf16.msra.mxu0 %v539
    %755 = vmatprep.subr.bf16.mxu0 0
    %756 = vmatpush1.bf16.msra.mxu0 %v538
    %757 = vmatprep.subr.bf16.mxu0 0
    %758 = vmatpush2.bf16.msra.mxu0 %v553
    %759 = vmatprep.subr.bf16.mxu0 0
    %760 = vmatpush2.bf16.msra.mxu0 %v552
    %761 = vmatprep.subr.bf16.mxu0 0
    %762 = vmatpush2.bf16.msra.mxu0 %v551
    %763 = vmatprep.subr.bf16.mxu0 0
    %764 = vmatpush2.bf16.msra.mxu0 %v550
    %765 = vmatprep.subr.bf16.mxu0 0
    %766 = vmatpush2.bf16.msra.mxu0 %v549
    %767 = vmatprep.subr.bf16.mxu0 0
    %768 = vmatpush2.bf16.msra.mxu0 %v548
    %769 = vmatprep.subr.bf16.mxu0 0
    %770 = vmatpush2.bf16.msra.mxu0 %v547
    %771 = vmatprep.subr.bf16.mxu0 0
    %772 = vmatpush2.bf16.msra.mxu0 %v546
    %773 = vmatprep.mubr.bf16.mxu0 %v98
    %774 = vmatmul.mubr.bf16.gmra.mxu0 %v97
    %v775 = vpop.f32.mrf.mxu0
    %v776 = vadd.f32 %v735, %v775
    %v777 = vpop.f32.mrf.mxu0
    %v778 = vpop.f32.mrf.mxu0
    %v779 = vadd.f32 %v738, %v778
    %v780 = vpop.f32.mrf.mxu0
    %781 = vdwg.mxu0
    %v782 = vmax.f32 %v776, 0.0
    %v783 = vmax.f32 %v779, 0.0
    %v784 = vpack.c.bf16 %v783, %v782
    %v785 = vld [vmem:[#allocation7] sm:$0xff]
    %v786 = vld [vmem:[#allocation7 + $0x8] sm:$0xff]
    %v787 = vld [vmem:[#allocation7 + $0x10] sm:$0xff]
    %v788 = vld [vmem:[#allocation7 + $0x18] sm:$0xff]
    %v789 = vld [vmem:[#allocation7 + $0x20] sm:$0xff]
    %v790 = vld [vmem:[#allocation7 + $0x28] sm:$0xff]
    %v791 = vld [vmem:[#allocation7 + $0x30] sm:$0xff]
    %v792 = vld [vmem:[#allocation7 + $0x38] sm:$0xff]
    %v793 = vld [vmem:[#allocation7 + $0x40] sm:$0xff]
    %v794 = vld [vmem:[#allocation7 + $0x48] sm:$0xff]
    %v795 = vld [vmem:[#allocation7 + $0x50] sm:$0xff]
    %v796 = vld [vmem:[#allocation7 + $0x58] sm:$0xff]
    %v797 = vld [vmem:[#allocation7 + $0x60] sm:$0xff]
    %v798 = vld [vmem:[#allocation7 + $0x68] sm:$0xff]
    %v799 = vld [vmem:[#allocation7 + $0x70] sm:$0xff]
    %v800 = vld [vmem:[#allocation7 + $0x78] sm:$0xff]
    %v801 = vld [vmem:[#allocation7 + $0x80] sm:$0xff]
    %v802 = vld [vmem:[#allocation7 + $0x88] sm:$0xff]
    %v803 = vld [vmem:[#allocation7 + $0x90] sm:$0xff]
    %v804 = vld [vmem:[#allocation7 + $0x98] sm:$0xff]
    %v805 = vld [vmem:[#allocation7 + $0xa0] sm:$0xff]
    %v806 = vld [vmem:[#allocation7 + $0xa8] sm:$0xff]
    %v807 = vld [vmem:[#allocation7 + $0xb0] sm:$0xff]
    %v808 = vld [vmem:[#allocation7 + $0xb8] sm:$0xff]
    %v809 = vld [vmem:[#allocation7 + $0xc0] sm:$0xff]
    %v810 = vld [vmem:[#allocation7 + $0xc8] sm:$0xff]
    %v811 = vld [vmem:[#allocation7 + $0xd0] sm:$0xff]
    %v812 = vld [vmem:[#allocation7 + $0xd8] sm:$0xff]
    %v813 = vld [vmem:[#allocation7 + $0xe0] sm:$0xff]
    %v814 = vld [vmem:[#allocation7 + $0xe8] sm:$0xff]
    %v815 = vld [vmem:[#allocation7 + $0xf0] sm:$0xff]
    %v816 = vld [vmem:[#allocation7 + $0xf8] sm:$0xff]
    %v817 = vld [vmem:[#allocation7 + $0x100] sm:$0xff]
    %v818 = vld [vmem:[#allocation7 + $0x108] sm:$0xff]
    %v819 = vld [vmem:[#allocation7 + $0x110] sm:$0xff]
    %v820 = vld [vmem:[#allocation7 + $0x118] sm:$0xff]
    %v821 = vld [vmem:[#allocation7 + $0x120] sm:$0xff]
    %v822 = vld [vmem:[#allocation7 + $0x128] sm:$0xff]
    %v823 = vld [vmem:[#allocation7 + $0x130] sm:$0xff]
    %v824 = vld [vmem:[#allocation7 + $0x138] sm:$0xff]
    %v825 = vld [vmem:[#allocation7 + $0x140] sm:$0xff]
    %v826 = vld [vmem:[#allocation7 + $0x148] sm:$0xff]
    %v827 = vld [vmem:[#allocation7 + $0x150] sm:$0xff]
    %v828 = vld [vmem:[#allocation7 + $0x158] sm:$0xff]
    %v829 = vld [vmem:[#allocation7 + $0x160] sm:$0xff]
    %v830 = vld [vmem:[#allocation7 + $0x168] sm:$0xff]
    %v831 = vld [vmem:[#allocation7 + $0x170] sm:$0xff]
    %v832 = vld [vmem:[#allocation7 + $0x178] sm:$0xff]
    %v833 = vld [vmem:[#allocation7 + $0x180] sm:$0xff]
    %v834 = vld [vmem:[#allocation7 + $0x188] sm:$0xff]
    %v835 = vld [vmem:[#allocation7 + $0x190] sm:$0xff]
    %v836 = vld [vmem:[#allocation7 + $0x198] sm:$0xff]
    %v837 = vld [vmem:[#allocation7 + $0x1a0] sm:$0xff]
    %v838 = vld [vmem:[#allocation7 + $0x1a8] sm:$0xff]
    %v839 = vld [vmem:[#allocation7 + $0x1b0] sm:$0xff]
    %v840 = vld [vmem:[#allocation7 + $0x1b8] sm:$0xff]
    %v841 = vld [vmem:[#allocation7 + $0x1c0] sm:$0xff]
    %v842 = vld [vmem:[#allocation7 + $0x1c8] sm:$0xff]
    %v843 = vld [vmem:[#allocation7 + $0x1d0] sm:$0xff]
    %v844 = vld [vmem:[#allocation7 + $0x1d8] sm:$0xff]
    %v845 = vld [vmem:[#allocation7 + $0x1e0] sm:$0xff]
    %v846 = vld [vmem:[#allocation7 + $0x1e8] sm:$0xff]
    %v847 = vld [vmem:[#allocation7 + $0x1f0] sm:$0xff]
    %v848 = vld [vmem:[#allocation7 + $0x1f8] sm:$0xff]
    %v849 = vld [vmem:[#allocation8] sm:$0xff]
    %v851 = vlaneseq
    %v852 = vshrl.u32 %v851, 7
    %v853 = vsub.s32 0, %v852
    %v854 = vrot.slane %v849, %v853
    %v855 = vlaneseq
    %v856 = vshrl.u32 %v855, 7
    %v857 = vsub.s32 1, %v856
    %v858 = vrot.slane %v849, %v857
    %v859 = vlaneseq
    %v860 = vshrl.u32 %v859, 7
    %v861 = vsub.s32 2, %v860
    %v862 = vrot.slane %v849, %v861
    %v863 = vlaneseq
    %v864 = vshrl.u32 %v863, 7
    %v865 = vsub.s32 3, %v864
    %v866 = vrot.slane %v849, %v865
    %v867 = vlaneseq
    %v868 = vshrl.u32 %v867, 7
    %v869 = vsub.s32 4, %v868
    %v870 = vrot.slane %v849, %v869
    %v871 = vlaneseq
    %v872 = vshrl.u32 %v871, 7
    %v873 = vsub.s32 5, %v872
    %v874 = vrot.slane %v849, %v873
    %v875 = vlaneseq
    %v876 = vshrl.u32 %v875, 7
    %v877 = vsub.s32 6, %v876
    %v878 = vrot.slane %v849, %v877
    %v879 = vlaneseq
    %v880 = vshrl.u32 %v879, 7
    %v881 = vsub.s32 7, %v880
    %v882 = vrot.slane %v849, %v881
    %v955 = vunpack.c.l.b16 %v785
    %v956 = vunpack.c.h.b16 %v785
    %v957 = vunpack.c.l.b16 %v786
    %v958 = vunpack.c.h.b16 %v786
    %v959 = vunpack.c.l.b16 %v787
    %v960 = vunpack.c.h.b16 %v787
    %v961 = vunpack.c.l.b16 %v788
    %v962 = vunpack.c.h.b16 %v788
    %v963 = vunpack.c.l.b16 %v789
    %v964 = vunpack.c.h.b16 %v789
    %v965 = vunpack.c.l.b16 %v790
    %v966 = vunpack.c.h.b16 %v790
    %v967 = vunpack.c.l.b16 %v791
    %v968 = vunpack.c.h.b16 %v791
    %v969 = vunpack.c.l.b16 %v792
    %v970 = vunpack.c.h.b16 %v792
    %v971 = vunpack.c.l.b16 %v793
    %v972 = vunpack.c.h.b16 %v793
    %v973 = vunpack.c.l.b16 %v794
    %v974 = vunpack.c.h.b16 %v794
    %v975 = vunpack.c.l.b16 %v795
    %v976 = vunpack.c.h.b16 %v795
    %v977 = vunpack.c.l.b16 %v796
    %v978 = vunpack.c.h.b16 %v796
    %v979 = vunpack.c.l.b16 %v797
    %v980 = vunpack.c.h.b16 %v797
    %v981 = vunpack.c.l.b16 %v798
    %v982 = vunpack.c.h.b16 %v798
    %v983 = vunpack.c.l.b16 %v799
    %v984 = vunpack.c.h.b16 %v799
    %v985 = vunpack.c.l.b16 %v800
    %v986 = vunpack.c.h.b16 %v800
    %v987 = vunpack.c.l.b16 %v801
    %v988 = vunpack.c.h.b16 %v801
    %v989 = vunpack.c.l.b16 %v802
    %v990 = vunpack.c.h.b16 %v802
    %v991 = vunpack.c.l.b16 %v803
    %v992 = vunpack.c.h.b16 %v803
    %v993 = vunpack.c.l.b16 %v804
    %v994 = vunpack.c.h.b16 %v804
    %v995 = vunpack.c.l.b16 %v805
    %v996 = vunpack.c.h.b16 %v805
    %v997 = vunpack.c.l.b16 %v806
    %v998 = vunpack.c.h.b16 %v806
    %v999 = vunpack.c.l.b16 %v807
    %v1000 = vunpack.c.h.b16 %v807
    %v1001 = vunpack.c.l.b16 %v808
    %v1002 = vunpack.c.h.b16 %v808
    %v1003 = vunpack.c.l.b16 %v809
    %v1004 = vunpack.c.h.b16 %v809
    %v1005 = vunpack.c.l.b16 %v810
    %v1006 = vunpack.c.h.b16 %v810
    %v1007 = vunpack.c.l.b16 %v811
    %v1008 = vunpack.c.h.b16 %v811
    %v1009 = vunpack.c.l.b16 %v812
    %v1010 = vunpack.c.h.b16 %v812
    %v1011 = vunpack.c.l.b16 %v813
    %v1012 = vunpack.c.h.b16 %v813
    %v1013 = vunpack.c.l.b16 %v814
    %v1014 = vunpack.c.h.b16 %v814
    %v1015 = vunpack.c.l.b16 %v815
    %v1016 = vunpack.c.h.b16 %v815
    %v1017 = vunpack.c.l.b16 %v816
    %v1018 = vunpack.c.h.b16 %v816
    %v1019 = vunpack.c.l.b16 %v817
    %v1020 = vunpack.c.h.b16 %v817
    %v1021 = vunpack.c.l.b16 %v818
    %v1022 = vunpack.c.h.b16 %v818
    %v1023 = vunpack.c.l.b16 %v819
    %v1024 = vunpack.c.h.b16 %v819
    %v1025 = vunpack.c.l.b16 %v820
    %v1026 = vunpack.c.h.b16 %v820
    %v1027 = vunpack.c.l.b16 %v821
    %v1028 = vunpack.c.h.b16 %v821
    %v1029 = vunpack.c.l.b16 %v822
    %v1030 = vunpack.c.h.b16 %v822
    %v1031 = vunpack.c.l.b16 %v823
    %v1032 = vunpack.c.h.b16 %v823
    %v1033 = vunpack.c.l.b16 %v824
    %v1034 = vunpack.c.h.b16 %v824
    %v1035 = vunpack.c.l.b16 %v825
    %v1036 = vunpack.c.h.b16 %v825
    %v1037 = vunpack.c.l.b16 %v826
    %v1038 = vunpack.c.h.b16 %v826
    %v1039 = vunpack.c.l.b16 %v827
    %v1040 = vunpack.c.h.b16 %v827
    %v1041 = vunpack.c.l.b16 %v828
    %v1042 = vunpack.c.h.b16 %v828
    %v1043 = vunpack.c.l.b16 %v829
    %v1044 = vunpack.c.h.b16 %v829
    %v1045 = vunpack.c.l.b16 %v830
    %v1046 = vunpack.c.h.b16 %v830
    %v1047 = vunpack.c.l.b16 %v831
    %v1048 = vunpack.c.h.b16 %v831
    %v1049 = vunpack.c.l.b16 %v832
    %v1050 = vunpack.c.h.b16 %v832
    %v1051 = vunpack.c.l.b16 %v833
    %v1052 = vunpack.c.h.b16 %v833
    %v1053 = vunpack.c.l.b16 %v834
    %v1054 = vunpack.c.h.b16 %v834
    %v1055 = vunpack.c.l.b16 %v835
    %v1056 = vunpack.c.h.b16 %v835
    %v1057 = vunpack.c.l.b16 %v836
    %v1058 = vunpack.c.h.b16 %v836
    %v1059 = vunpack.c.l.b16 %v837
    %v1060 = vunpack.c.h.b16 %v837
    %v1061 = vunpack.c.l.b16 %v838
    %v1062 = vunpack.c.h.b16 %v838
    %v1063 = vunpack.c.l.b16 %v839
    %v1064 = vunpack.c.h.b16 %v839
    %v1065 = vunpack.c.l.b16 %v840
    %v1066 = vunpack.c.h.b16 %v840
    %v1067 = vunpack.c.l.b16 %v841
    %v1068 = vunpack.c.h.b16 %v841
    %v1069 = vunpack.c.l.b16 %v842
    %v1070 = vunpack.c.h.b16 %v842
    %v1071 = vunpack.c.l.b16 %v843
    %v1072 = vunpack.c.h.b16 %v843
    %v1073 = vunpack.c.l.b16 %v844
    %v1074 = vunpack.c.h.b16 %v844
    %v1075 = vunpack.c.l.b16 %v845
    %v1076 = vunpack.c.h.b16 %v845
    %v1077 = vunpack.c.l.b16 %v846
    %v1078 = vunpack.c.h.b16 %v846
    %v1079 = vunpack.c.l.b16 %v847
    %v1080 = vunpack.c.h.b16 %v847
    %v1081 = vunpack.c.l.b16 %v848
    %v1082 = vunpack.c.h.b16 %v848
    %v1083 = vpack.c.b16 %v963, %v955
    %v1084 = vpack.c.b16 %v964, %v956
    %v1085 = vpack.c.b16 %v965, %v957
    %v1086 = vpack.c.b16 %v966, %v958
    %v1087 = vpack.c.b16 %v967, %v959
    %v1088 = vpack.c.b16 %v968, %v960
    %v1089 = vpack.c.b16 %v969, %v961
    %v1090 = vpack.c.b16 %v970, %v962
    %v1091 = vpack.c.b16 %v979, %v971
    %v1092 = vpack.c.b16 %v980, %v972
    %v1093 = vpack.c.b16 %v981, %v973
    %v1094 = vpack.c.b16 %v982, %v974
    %v1095 = vpack.c.b16 %v983, %v975
    %v1096 = vpack.c.b16 %v984, %v976
    %v1097 = vpack.c.b16 %v985, %v977
    %v1098 = vpack.c.b16 %v986, %v978
    %v1099 = vpack.c.b16 %v995, %v987
    %v1100 = vpack.c.b16 %v996, %v988
    %v1101 = vpack.c.b16 %v997, %v989
    %v1102 = vpack.c.b16 %v998, %v990
    %v1103 = vpack.c.b16 %v999, %v991
    %v1104 = vpack.c.b16 %v1000, %v992
    %v1105 = vpack.c.b16 %v1001, %v993
    %v1106 = vpack.c.b16 %v1002, %v994
    %v1107 = vpack.c.b16 %v1011, %v1003
    %v1108 = vpack.c.b16 %v1012, %v1004
    %v1109 = vpack.c.b16 %v1013, %v1005
    %v1110 = vpack.c.b16 %v1014, %v1006
    %v1111 = vpack.c.b16 %v1015, %v1007
    %v1112 = vpack.c.b16 %v1016, %v1008
    %v1113 = vpack.c.b16 %v1017, %v1009
    %v1114 = vpack.c.b16 %v1018, %v1010
    %v1115 = vpack.c.b16 %v1027, %v1019
    %v1116 = vpack.c.b16 %v1028, %v1020
    %v1117 = vpack.c.b16 %v1029, %v1021
    %v1118 = vpack.c.b16 %v1030, %v1022
    %v1119 = vpack.c.b16 %v1031, %v1023
    %v1120 = vpack.c.b16 %v1032, %v1024
    %v1121 = vpack.c.b16 %v1033, %v1025
    %v1122 = vpack.c.b16 %v1034, %v1026
    %v1123 = vpack.c.b16 %v1043, %v1035
    %v1124 = vpack.c.b16 %v1044, %v1036
    %v1125 = vpack.c.b16 %v1045, %v1037
    %v1126 = vpack.c.b16 %v1046, %v1038
    %v1127 = vpack.c.b16 %v1047, %v1039
    %v1128 = vpack.c.b16 %v1048, %v1040
    %v1129 = vpack.c.b16 %v1049, %v1041
    %v1130 = vpack.c.b16 %v1050, %v1042
    %v1131 = vpack.c.b16 %v1059, %v1051
    %v1132 = vpack.c.b16 %v1060, %v1052
    %v1133 = vpack.c.b16 %v1061, %v1053
    %v1134 = vpack.c.b16 %v1062, %v1054
    %v1135 = vpack.c.b16 %v1063, %v1055
    %v1136 = vpack.c.b16 %v1064, %v1056
    %v1137 = vpack.c.b16 %v1065, %v1057
    %v1138 = vpack.c.b16 %v1066, %v1058
    %v1139 = vpack.c.b16 %v1075, %v1067
    %v1140 = vpack.c.b16 %v1076, %v1068
    %v1141 = vpack.c.b16 %v1077, %v1069
    %v1142 = vpack.c.b16 %v1078, %v1070
    %v1143 = vpack.c.b16 %v1079, %v1071
    %v1144 = vpack.c.b16 %v1080, %v1072
    %v1145 = vpack.c.b16 %v1081, %v1073
    %v1146 = vpack.c.b16 %v1082, %v1074
    %1211 = vmatprep.subr.bf16.mxu0 %v1140
    %1212 = vmatpush1.bf16.msra.mxu0 %v1139
    %1213 = vmatprep.subr.bf16.mxu0 %v1132
    %1214 = vmatpush1.bf16.msra.mxu0 %v1131
    %1215 = vmatprep.subr.bf16.mxu0 %v1124
    %1216 = vmatpush1.bf16.msra.mxu0 %v1123
    %1217 = vmatprep.subr.bf16.mxu0 %v1116
    %1218 = vmatpush1.bf16.msra.mxu0 %v1115
    %1219 = vmatprep.subr.bf16.mxu0 %v1108
    %1220 = vmatpush1.bf16.msra.mxu0 %v1107
    %1221 = vmatprep.subr.bf16.mxu0 %v1100
    %1222 = vmatpush1.bf16.msra.mxu0 %v1099
    %1223 = vmatprep.subr.bf16.mxu0 %v1092
    %1224 = vmatpush1.bf16.msra.mxu0 %v1091
    %1225 = vmatprep.subr.bf16.mxu0 %v1084
    %1226 = vmatpush1.bf16.msra.mxu0 %v1083
    %1227 = vmatprep.subr.bf16.mxu0 0
    %1228 = vmatpush2.bf16.msra.mxu0 0
    %1229 = vmatprep.subr.bf16.mxu0 0
    %1230 = vmatpush2.bf16.msra.mxu0 0
    %1231 = vmatprep.subr.bf16.mxu0 0
    %1232 = vmatpush2.bf16.msra.mxu0 0
    %1233 = vmatprep.subr.bf16.mxu0 0
    %1234 = vmatpush2.bf16.msra.mxu0 0
    %1235 = vmatprep.subr.bf16.mxu0 0
    %1236 = vmatpush2.bf16.msra.mxu0 0
    %1237 = vmatprep.subr.bf16.mxu0 0
    %1238 = vmatpush2.bf16.msra.mxu0 0
    %1239 = vmatprep.subr.bf16.mxu0 0
    %1240 = vmatpush2.bf16.msra.mxu0 0
    %1241 = vmatprep.subr.bf16.mxu0 0
    %1242 = vmatpush2.bf16.msra.mxu0 0
    %1243 = vmatprep.mubr.bf16.mxu0 0
    %1244 = vmatmul.mubr.bf16.gmra.mxu0 %v784
    %v1245 = vpop.f32.mrf.mxu0
    %v1246 = vadd.f32 %v854, %v1245
    %v1247 = vpop.f32.mrf.mxu0
    %v1248 = vadd.f32 %v858, %v1247
    %v1249 = vpop.f32.mrf.mxu0
    %v1250 = vadd.f32 %v854, %v1249
    %v1251 = vpop.f32.mrf.mxu0
    %v1252 = vadd.f32 %v858, %v1251
    %1253 = vdwg.mxu0
    %1254 = vmatprep.subr.bf16.mxu0 %v1142
    %1255 = vmatpush1.bf16.msra.mxu0 %v1141
    %1256 = vmatprep.subr.bf16.mxu0 %v1134
    %1257 = vmatpush1.bf16.msra.mxu0 %v1133
    %1258 = vmatprep.subr.bf16.mxu0 %v1126
    %1259 = vmatpush1.bf16.msra.mxu0 %v1125
    %1260 = vmatprep.subr.bf16.mxu0 %v1118
    %1261 = vmatpush1.bf16.msra.mxu0 %v1117
    %1262 = vmatprep.subr.bf16.mxu0 %v1110
    %1263 = vmatpush1.bf16.msra.mxu0 %v1109
    %1264 = vmatprep.subr.bf16.mxu0 %v1102
    %1265 = vmatpush1.bf16.msra.mxu0 %v1101
    %1266 = vmatprep.subr.bf16.mxu0 %v1094
    %1267 = vmatpush1.bf16.msra.mxu0 %v1093
    %1268 = vmatprep.subr.bf16.mxu0 %v1086
    %1269 = vmatpush1.bf16.msra.mxu0 %v1085
    %1270 = vmatprep.subr.bf16.mxu0 0
    %1271 = vmatpush2.bf16.msra.mxu0 0
    %1272 = vmatprep.subr.bf16.mxu0 0
    %1273 = vmatpush2.bf16.msra.mxu0 0
    %1274 = vmatprep.subr.bf16.mxu0 0
    %1275 = vmatpush2.bf16.msra.mxu0 0
    %1276 = vmatprep.subr.bf16.mxu0 0
    %1277 = vmatpush2.bf16.msra.mxu0 0
    %1278 = vmatprep.subr.bf16.mxu0 0
    %1279 = vmatpush2.bf16.msra.mxu0 0
    %1280 = vmatprep.subr.bf16.mxu0 0
    %1281 = vmatpush2.bf16.msra.mxu0 0
    %1282 = vmatprep.subr.bf16.mxu0 0
    %1283 = vmatpush2.bf16.msra.mxu0 0
    %1284 = vmatprep.subr.bf16.mxu0 0
    %1285 = vmatpush2.bf16.msra.mxu0 0
    %1286 = vmatprep.mubr.bf16.mxu0 0
    %1287 = vmatmul.mubr.bf16.gmra.mxu0 %v784
    %v1288 = vpop.f32.mrf.mxu0
    %v1289 = vadd.f32 %v862, %v1288
    %v1290 = vpop.f32.mrf.mxu0
    %v1291 = vadd.f32 %v866, %v1290
    %v1292 = vpop.f32.mrf.mxu0
    %v1293 = vadd.f32 %v862, %v1292
    %v1294 = vpop.f32.mrf.mxu0
    %v1295 = vadd.f32 %v866, %v1294
    %1296 = vdwg.mxu0
    %1297 = vmatprep.subr.bf16.mxu0 %v1144
    %1298 = vmatpush1.bf16.msra.mxu0 %v1143
    %1299 = vmatprep.subr.bf16.mxu0 %v1136
    %1300 = vmatpush1.bf16.msra.mxu0 %v1135
    %1301 = vmatprep.subr.bf16.mxu0 %v1128
    %1302 = vmatpush1.bf16.msra.mxu0 %v1127
    %1303 = vmatprep.subr.bf16.mxu0 %v1120
    %1304 = vmatpush1.bf16.msra.mxu0 %v1119
    %1305 = vmatprep.subr.bf16.mxu0 %v1112
    %1306 = vmatpush1.bf16.msra.mxu0 %v1111
    %1307 = vmatprep.subr.bf16.mxu0 %v1104
    %1308 = vmatpush1.bf16.msra.mxu0 %v1103
    %1309 = vmatprep.subr.bf16.mxu0 %v1096
    %1310 = vmatpush1.bf16.msra.mxu0 %v1095
    %1311 = vmatprep.subr.bf16.mxu0 %v1088
    %1312 = vmatpush1.bf16.msra.mxu0 %v1087
    %1313 = vmatprep.subr.bf16.mxu0 0
    %1314 = vmatpush2.bf16.msra.mxu0 0
    %1315 = vmatprep.subr.bf16.mxu0 0
    %1316 = vmatpush2.bf16.msra.mxu0 0
    %1317 = vmatprep.subr.bf16.mxu0 0
    %1318 = vmatpush2.bf16.msra.mxu0 0
    %1319 = vmatprep.subr.bf16.mxu0 0
    %1320 = vmatpush2.bf16.msra.mxu0 0
    %1321 = vmatprep.subr.bf16.mxu0 0
    %1322 = vmatpush2.bf16.msra.mxu0 0
    %1323 = vmatprep.subr.bf16.mxu0 0
    %1324 = vmatpush2.bf16.msra.mxu0 0
    %1325 = vmatprep.subr.bf16.mxu0 0
    %1326 = vmatpush2.bf16.msra.mxu0 0
    %1327 = vmatprep.subr.bf16.mxu0 0
    %1328 = vmatpush2.bf16.msra.mxu0 0
    %1329 = vmatprep.mubr.bf16.mxu0 0
    %1330 = vmatmul.mubr.bf16.gmra.mxu0 %v784
    %v1331 = vpop.f32.mrf.mxu0
    %v1332 = vadd.f32 %v870, %v1331
    %v1333 = vpop.f32.mrf.mxu0
    %v1334 = vadd.f32 %v874, %v1333
    %v1335 = vpop.f32.mrf.mxu0
    %v1336 = vadd.f32 %v870, %v1335
    %v1337 = vpop.f32.mrf.mxu0
    %v1338 = vadd.f32 %v874, %v1337
    %1339 = vdwg.mxu0
    %1340 = vmatprep.subr.bf16.mxu0 %v1146
    %1341 = vmatpush1.bf16.msra.mxu0 %v1145
    %1342 = vmatprep.subr.bf16.mxu0 %v1138
    %1343 = vmatpush1.bf16.msra.mxu0 %v1137
    %1344 = vmatprep.subr.bf16.mxu0 %v1130
    %1345 = vmatpush1.bf16.msra.mxu0 %v1129
    %1346 = vmatprep.subr.bf16.mxu0 %v1122
    %1347 = vmatpush1.bf16.msra.mxu0 %v1121
    %1348 = vmatprep.subr.bf16.mxu0 %v1114
    %1349 = vmatpush1.bf16.msra.mxu0 %v1113
    %1350 = vmatprep.subr.bf16.mxu0 %v1106
    %1351 = vmatpush1.bf16.msra.mxu0 %v1105
    %1352 = vmatprep.subr.bf16.mxu0 %v1098
    %1353 = vmatpush1.bf16.msra.mxu0 %v1097
    %1354 = vmatprep.subr.bf16.mxu0 %v1090
    %1355 = vmatpush1.bf16.msra.mxu0 %v1089
    %1356 = vmatprep.subr.bf16.mxu0 0
    %1357 = vmatpush2.bf16.msra.mxu0 0
    %1358 = vmatprep.subr.bf16.mxu0 0
    %1359 = vmatpush2.bf16.msra.mxu0 0
    %1360 = vmatprep.subr.bf16.mxu0 0
    %1361 = vmatpush2.bf16.msra.mxu0 0
    %1362 = vmatprep.subr.bf16.mxu0 0
    %1363 = vmatpush2.bf16.msra.mxu0 0
    %1364 = vmatprep.subr.bf16.mxu0 0
    %1365 = vmatpush2.bf16.msra.mxu0 0
    %1366 = vmatprep.subr.bf16.mxu0 0
    %1367 = vmatpush2.bf16.msra.mxu0 0
    %1368 = vmatprep.subr.bf16.mxu0 0
    %1369 = vmatpush2.bf16.msra.mxu0 0
    %1370 = vmatprep.subr.bf16.mxu0 0
    %1371 = vmatpush2.bf16.msra.mxu0 0
    %1372 = vmatprep.mubr.bf16.mxu0 0
    %1373 = vmatmul.mubr.bf16.gmra.mxu0 %v784
    %v1374 = vpop.f32.mrf.mxu0
    %v1375 = vadd.f32 %v878, %v1374
    %v1376 = vpop.f32.mrf.mxu0
    %v1377 = vadd.f32 %v882, %v1376
    %v1378 = vpop.f32.mrf.mxu0
    %v1379 = vadd.f32 %v878, %v1378
    %v1380 = vpop.f32.mrf.mxu0
    %v1381 = vadd.f32 %v882, %v1380
    %1382 = vdwg.mxu0
    %v1383 = vxor.u32 %v1246, 2147483648
    %v1384 = vxor.u32 %v1248, 2147483648
    %v1385 = vxor.u32 %v1289, 2147483648
    %v1386 = vxor.u32 %v1291, 2147483648
    %v1387 = vxor.u32 %v1332, 2147483648
    %v1388 = vxor.u32 %v1334, 2147483648
    %v1389 = vxor.u32 %v1375, 2147483648
    %v1390 = vxor.u32 %v1377, 2147483648
    %v1391 = vxor.u32 %v1250, 2147483648
    %v1392 = vxor.u32 %v1252, 2147483648
    %v1393 = vxor.u32 %v1293, 2147483648
    %v1394 = vxor.u32 %v1295, 2147483648
    %v1395 = vxor.u32 %v1336, 2147483648
    %v1396 = vxor.u32 %v1338, 2147483648
    %v1397 = vxor.u32 %v1379, 2147483648
    %v1398 = vxor.u32 %v1381, 2147483648
    %v1399 = vmul.f32 %v1383, 1.442695
    %v1400 = vpow.pop %v1399
    %v1401 = vmul.f32 %v1384, 1.442695
    %v1402 = vpow.pop %v1401
    %v1403 = vmul.f32 %v1385, 1.442695
    %v1404 = vpow.pop %v1403
    %v1405 = vmul.f32 %v1386, 1.442695
    %v1406 = vpow.pop %v1405
    %v1407 = vmul.f32 %v1387, 1.442695
    %v1408 = vpow.pop %v1407
    %v1409 = vmul.f32 %v1388, 1.442695
    %v1410 = vpow.pop %v1409
    %v1411 = vmul.f32 %v1389, 1.442695
    %v1412 = vpow.pop %v1411
    %v1413 = vmul.f32 %v1390, 1.442695
    %v1414 = vpow.pop %v1413
    %v1415 = vmul.f32 %v1391, 1.442695
    %v1416 = vpow.pop %v1415
    %v1417 = vmul.f32 %v1392, 1.442695
    %v1418 = vpow.pop %v1417
    %v1419 = vmul.f32 %v1393, 1.442695
    %v1420 = vpow.pop %v1419
    %v1421 = vmul.f32 %v1394, 1.442695
    %v1422 = vpow.pop %v1421
    %v1423 = vmul.f32 %v1395, 1.442695
    %v1424 = vpow.pop %v1423
    %v1425 = vmul.f32 %v1396, 1.442695
    %v1426 = vpow.pop %v1425
    %v1427 = vmul.f32 %v1397, 1.442695
    %v1428 = vpow.pop %v1427
    %v1429 = vmul.f32 %v1398, 1.442695
    %v1430 = vpow.pop %v1429
    %v1431 = vadd.f32 %v1400, 1.0
    %v1432 = vadd.f32 %v1402, 1.0
    %v1433 = vadd.f32 %v1404, 1.0
    %v1434 = vadd.f32 %v1406, 1.0
    %v1435 = vadd.f32 %v1408, 1.0
    %v1436 = vadd.f32 %v1410, 1.0
    %v1437 = vadd.f32 %v1412, 1.0
    %v1438 = vadd.f32 %v1414, 1.0
    %v1439 = vadd.f32 %v1416, 1.0
    %v1440 = vadd.f32 %v1418, 1.0
    %v1441 = vadd.f32 %v1420, 1.0
    %v1442 = vadd.f32 %v1422, 1.0
    %v1443 = vadd.f32 %v1424, 1.0
    %v1444 = vadd.f32 %v1426, 1.0
    %v1445 = vadd.f32 %v1428, 1.0
    %v1446 = vadd.f32 %v1430, 1.0
    %v1447 = vrcp.pop %v1431
    %v1448 = vmul.f32 1.0, %v1447
    %v1449 = vrcp.pop %v1432
    %v1450 = vmul.f32 1.0, %v1449
    %v1451 = vrcp.pop %v1433
    %v1452 = vmul.f32 1.0, %v1451
    %v1453 = vrcp.pop %v1434
    %v1454 = vmul.f32 1.0, %v1453
    %v1455 = vrcp.pop %v1435
    %v1456 = vmul.f32 1.0, %v1455
    %v1457 = vrcp.pop %v1436
    %v1458 = vmul.f32 1.0, %v1457
    %v1459 = vrcp.pop %v1437
    %v1460 = vmul.f32 1.0, %v1459
    %v1461 = vrcp.pop %v1438
    %v1462 = vmul.f32 1.0, %v1461
    %v1463 = vrcp.pop %v1439
    %v1464 = vmul.f32 1.0, %v1463
    %v1465 = vrcp.pop %v1440
    %v1466 = vmul.f32 1.0, %v1465
    %v1467 = vrcp.pop %v1441
    %v1468 = vmul.f32 1.0, %v1467
    %v1469 = vrcp.pop %v1442
    %v1470 = vmul.f32 1.0, %v1469
    %v1471 = vrcp.pop %v1443
    %v1472 = vmul.f32 1.0, %v1471
    %v1473 = vrcp.pop %v1444
    %v1474 = vmul.f32 1.0, %v1473
    %v1475 = vrcp.pop %v1445
    %v1476 = vmul.f32 1.0, %v1475
    %v1477 = vrcp.pop %v1446
    %v1478 = vmul.f32 1.0, %v1477
    %1479 = vst [vmem:[#allocation10] sm:$0xff] %v1448
    %1480 = vst [vmem:[#allocation10 + $0x8] sm:$0xff] %v1450
    %1481 = vst [vmem:[#allocation10 + $0x10] sm:$0xff] %v1452
    %1482 = vst [vmem:[#allocation10 + $0x18] sm:$0xff] %v1454
    %1483 = vst [vmem:[#allocation10 + $0x20] sm:$0xff] %v1456
    %1484 = vst [vmem:[#allocation10 + $0x28] sm:$0xff] %v1458
    %1485 = vst [vmem:[#allocation10 + $0x30] sm:$0xff] %v1460
    %1486 = vst [vmem:[#allocation10 + $0x38] sm:$0xff] %v1462
    %1487 = vst [vmem:[#allocation10 + $0x40] sm:$0xff] %v1464
    %1488 = vst [vmem:[#allocation10 + $0x48] sm:$0xff] %v1466
    %1489 = vst [vmem:[#allocation10 + $0x50] sm:$0xff] %v1468
    %1490 = vst [vmem:[#allocation10 + $0x58] sm:$0xff] %v1470
    %1491 = vst [vmem:[#allocation10 + $0x60] sm:$0xff] %v1472
    %1492 = vst [vmem:[#allocation10 + $0x68] sm:$0xff] %v1474
    %1493 = vst [vmem:[#allocation10 + $0x70] sm:$0xff] %v1476
    %1494 = vst [vmem:[#allocation10 + $0x78] sm:$0xff] %v1478
    // Predicated region
    $region38: #{tpu_custom_call.1} parent=1 // pred_check
      _
    $region39: #{tpu_custom_call.1} parent=1 // pred_check_branch
      %1496 = sbr.rel (0) target = $region41
    $region40: #{tpu_custom_call.1} parent=1 // pred_region
      %s1498 = ssub.s32 2048, 2048
      %1499 = vsyncadd [#allocation4], %s1498
      %s1500 = sshll.u32 [#allocation10], 4
      %s1501 = int_to_ptr.vmem [resolvable:$true] %s1500
      %1506 = dma.vmem_to_hbm [thread:$0]  %s1501, 2048, %s5, [#allocation4], 1024, 1024, 64
    $region41: #{tpu_custom_call.1} parent=1 // pred_fallthru
      _
    // Predicated region
    $region42: #{tpu_custom_call.1} parent=1 // pred_check
      _
    $region43: #{tpu_custom_call.1} parent=1 // pred_check_branch
      %1508 = sbr.rel (0) target = $region45
    $region44: #{tpu_custom_call.1} parent=1 // pred_region
      %1509 = dma.done [#allocation4], 2048
    $region45: #{tpu_custom_call.1} parent=1 // pred_fallthru
      _
    %1510 = vsyncpa [#allocation3], 1
    %1511 = vsyncpa [#allocation6], 1
    %1512 = vsyncpa [#allocation9], 1
    %1513 = vsyncpa [#allocation4], 1

</llo_original>
